<compile_context>
chip_gen: v6e
topology: v6e:2x2x1
jax: 0.10.0
libtpu: 0.0.40
codegen_flags: <defaults>
</compile_context>

<pallas_src>
import functools
import math
import random

import numpy as np
import jax
import jax.numpy as jnp
from jax.experimental import pallas as pl
from jax.experimental.pallas import tpu as pltpu


def _bev_grid_sample_kernel(cs_ref, feat_ref, out_ref, mat_ref, *,
                            H, W, TN, compute_dtype):
    """One grid step of the tiled bilinear grid_sample.

    cs_ref   : SMEM (2,) f32                       -- [cos, sin] of rotation.
    feat_ref : VMEM (BC_TILE, HW) compute_dtype    -- one BC tile, all inputs.
    out_ref  : VMEM (BC_TILE, TN) feat dtype       -- one output-pixel tile.
    mat_ref  : VMEM (HW, TN) compute_dtype scratch -- sampling slab, built at
               bc == 0 and reused for all BC tiles of this output tile.
    """
    HW = H * W
    j = pl.program_id(0)    # output-pixel tile index (parallel)
    bc = pl.program_id(1)   # BC tile index (arbitrary, innermost)

    @pl.when(bc == 0)
    def _build_slab():
        cos = cs_ref[0]
        sin = cs_ref[1]

        # Global flat index of the output pixels handled by this tile.
        jj = jax.lax.broadcasted_iota(jnp.int32, (1, TN), 1) + j * TN
        jj_f = jj.astype(jnp.float32)

        # Split flat index into (row, col) without vector integer div/mod:
        # f32 divide + exact integer fix-up (jj << 2**24 so values are exact).
        h_o = jnp.floor((jj_f + 0.5) * (1.0 / W))
        w_o = jj_f - h_o * W
        h_o = jnp.where(w_o < 0.0, h_o - 1.0, h_o)
        h_o = jnp.where(w_o >= W, h_o + 1.0, h_o)
        w_o = jj_f - h_o * W

        # Normalized grid (same math as the torch module), rotated.
        xn = 2.0 * (w_o + 0.5) / W - 1.0
        yn = 2.0 * (h_o + 0.5) / H - 1.0
        xr = cos * xn - sin * yn
        yr = sin * xn + cos * yn

        # grid_sample(align_corners=False): normalized -> pixel coordinates.
        ix = ((xr + 1.0) * W - 1.0) * 0.5
        iy = ((yr + 1.0) * H - 1.0) * 0.5

        x0f = jnp.floor(ix)
        y0f = jnp.floor(iy)
        wx1 = ix - x0f
        wy1 = iy - y0f
        wx0 = 1.0 - wx1
        wy0 = 1.0 - wy1
        x0 = x0f.astype(jnp.int32)
        y0 = y0f.astype(jnp.int32)
        x1 = x0 + 1
        y1 = y0 + 1

        # zeros padding: fold validity into the (1, TN) weights BEFORE the
        # (HW, TN) broadcast, so aliased out-of-bounds indices contribute 0.
        vx0 = (x0 >= 0) & (x0 < W)
        vx1 = (x1 >= 0) & (x1 < W)
        vy0 = (y0 >= 0) & (y0 < H)
        vy1 = (y1 >= 0) & (y1 < H)
        w00 = jnp.where(vy0 & vx0, wy0 * wx0, 0.0)
        w01 = jnp.where(vy0 & vx1, wy0 * wx1, 0.0)
        w10 = jnp.where(vy1 & vx0, wy1 * wx0, 0.0)
        w11 = jnp.where(vy1 & vx1, wy1 * wx1, 0.0)

        # The four corners share one base flat index:
        #   (y0,x0)=s00, (y0,x1)=s00+1, (y1,x0)=s00+W, (y1,x1)=s00+W+1.
        # One broadcast subtract + four compares against scalar constants.
        s00 = y0 * W + x0
        diff = jax.lax.broadcasted_iota(jnp.int32, (HW, TN), 0) - s00

        m = jnp.where(diff == 0, w00, 0.0)
        m = m + jnp.where(diff == 1, w01, 0.0)
        m = m + jnp.where(diff == W, w10, 0.0)
        m = m + jnp.where(diff == W + 1, w11, 0.0)
        mat_ref[...] = m.astype(compute_dtype)

    out_ref[...] = jnp.dot(
        feat_ref[...], mat_ref[...],
        preferred_element_type=jnp.float32).astype(out_ref.dtype)


def _pick_output_tile(HW):
    """Lane-dense output tile (multiple of 128) with bounded build temporaries."""
    if HW % 128 != 0:
        return HW                       # tiny/irregular grid: one full tile
    budget = 8 * 1024 * 1024            # cap the (HW, TN) f32 build temporaries
    tn_cap = max(128, budget // (HW * 4))
    for tn in (2048, 1024, 512, 256, 128):
        if tn <= tn_cap and HW % tn == 0:
            return tn
    return 128


def pallas_grid_sample(feat, cos, sin, *, compute_dtype=jnp.bfloat16):
    """Bilinear rotation grid_sample (zeros padding, align_corners=False).

    feat: (B, C, H, W); cos/sin: 2x2 rotation matrix entries.
    Returns the rotated features in feat's dtype.
    """
    B, C, H, W = feat.shape
    BC, HW = B * C, H * W
    out_dtype = feat.dtype
    compute_dtype = jnp.dtype(compute_dtype)
    compute_bytes = compute_dtype.itemsize

    TN = _pick_output_tile(HW)
    nj = HW // TN

    # BC tiling: pad to a multiple of 8 (sublane alignment); full BC when it
    # fits, otherwise 256-row tiles streamed through the pipeline.
    BC_pad0 = ((BC + 7) // 8) * 8
    if BC_pad0 <= 256:
        BC_TILE = BC_pad0
        BC_pad = BC_pad0
    else:
        BC_TILE = 256
        BC_pad = pl.cdiv(BC_pad0, BC_TILE) * BC_TILE
    nbc = BC_pad // BC_TILE

    feat_flat = feat.reshape(BC, HW)
    if compute_dtype != feat_flat.dtype:
        feat_flat = feat_flat.astype(compute_dtype)   # bf16: halves HBM traffic
    if BC_pad != BC:
        feat_flat = jnp.pad(feat_flat, ((0, BC_pad - BC), (0, 0)))

    cs = jnp.asarray([cos, sin], dtype=jnp.float32)

    out_bytes = jnp.dtype(out_dtype).itemsize
    est = (2 * BC_TILE * HW * compute_bytes       # double-buffered feat blocks
           + 2 * BC_TILE * TN * out_bytes         # double-buffered out blocks
           + HW * TN * compute_bytes              # sampling-slab scratch
           + 3 * HW * TN * 4)                     # slab-build temporaries
    vmem_limit = int(min(max(1.2 * est, 16 * 2**20), 64 * 2**20))

    kernel = functools.partial(_bev_grid_sample_kernel, H=H, W=W, TN=TN,
                               compute_dtype=compute_dtype)

    out_flat = pl.pallas_call(
        kernel,
        out_shape=jax.ShapeDtypeStruct((BC_pad, HW), out_dtype),
        grid=(nj, nbc),
        in_specs=[
            pl.BlockSpec(memory_space=pltpu.MemorySpace.SMEM),   # [cos, sin]
            pl.BlockSpec((BC_TILE, HW), lambda j, b: (b, 0)),    # feat BC tile
        ],
        out_specs=pl.BlockSpec((BC_TILE, TN), lambda j, b: (b, j)),
        scratch_shapes=[pltpu.VMEM((HW, TN), compute_dtype)],
        compiler_params=pltpu.CompilerParams(
            dimension_semantics=("parallel", "arbitrary"),
            vmem_limit_bytes=vmem_limit,
        ),
    )(cs, feat_flat)

    if BC_pad != BC:
        out_flat = out_flat[:BC]
    return out_flat.reshape(B, C, H, W)


class BEVRandomRotate:
    """JAX/Pallas port of BEVRandomRotate (no learnable parameters)."""

    def __init__(self, prob=0.5, max_rotate_degree=22.5,
                 pc_range=(-50.0, -50.0, -5.0, 50.0, 50.0, 3.0),
                 compute_dtype=jnp.bfloat16):
        # compute_dtype: MXU dtype for the grid-sample matmul.  bfloat16 is
        # full-rate on v6e/v7x and halves feat traffic; pass jnp.float32 for
        # bit-tight outputs.  Weight/coordinate math is f32 either way (v5e).
        self.prob = prob
        self.max_rotate_degree = max_rotate_degree
        self.pc_range = list(pc_range)
        self.compute_dtype = compute_dtype
        self.training = True

    @staticmethod
    def _get_rotation_matrix(rotate_degrees):
        radian = math.radians(rotate_degrees)
        return np.array([[np.cos(radian), -np.sin(radian), 0.0],
                         [np.sin(radian), np.cos(radian), 0.0],
                         [0.0, 0.0, 1.0]], dtype=np.float32)

    def _filter_gt_bboxes(self, boxes, labels):
        # Simplified mmdet3d in_range_bev: keep centers inside the BEV range.
        bev = [self.pc_range[0], self.pc_range[1], self.pc_range[3], self.pc_range[4]]
        mask = ((boxes[:, 0] > bev[0]) & (boxes[:, 1] > bev[1]) &
                (boxes[:, 0] < bev[2]) & (boxes[:, 1] < bev[3]))
        return boxes[mask], labels[mask]

    def forward(self, feat, gt_bboxes_3d, gt_labels_3d, seed=0):
        B, C, H, W = feat.shape
        rng = random.Random(seed)
        prob = rng.uniform(0, 1)
        if prob > self.prob or not self.training:
            return feat

        rotation_degree = rng.uniform(-self.max_rotate_degree, self.max_rotate_degree)
        rot3 = self._get_rotation_matrix(rotation_degree)

        # TODO(synk): mmdet3d LiDARInstance3DBoxes.rotate / in_range_bev are custom
        # box-object ops with dynamic output shapes; implemented as simplified
        # host-side numpy on (N, 7) [x,y,z,dx,dy,dz,yaw] arrays (glue, not Pallas).
        for b in range(len(gt_bboxes_3d)):
            boxes = np.asarray(gt_bboxes_3d[b], dtype=np.float32).copy()
            labels = np.asarray(gt_labels_3d[b]).copy()
            if boxes.size:
                boxes[:, :3] = boxes[:, :3] @ rot3.T
                boxes[:, 6] = boxes[:, 6] + math.radians(rotation_degree)
                boxes, labels = self._filter_gt_bboxes(boxes, labels)
            gt_bboxes_3d[b] = boxes
            gt_labels_3d[b] = labels

        cos = float(rot3[0, 0])
        sin = float(rot3[1, 0])
        return pallas_grid_sample(feat, cos, sin, compute_dtype=self.compute_dtype)


def _grid_sample_ref(feat, ix, iy):
    """Reference bilinear grid_sample, padding_mode='zeros', align_corners=False."""
    feat = np.asarray(feat)
    ix = np.asarray(ix)
    iy = np.asarray(iy)
    B, C, H, W = feat.shape
    out = np.zeros_like(feat)
    for h in range(H):
        for w in range(W):
            x, y = ix[h, w], iy[h, w]
            x0, y0 = int(np.floor(x)), int(np.floor(y))
            wx1, wy1 = x - x0, y - y0
            corners = [(y0, x0, (1 - wy1) * (1 - wx1)),
                       (y0, x0 + 1, (1 - wy1) * wx1),
                       (y0 + 1, x0, wy1 * (1 - wx1)),
                       (y0 + 1, x0 + 1, wy1 * wx1)]
            for yy, xx, wt in corners:
                if 0 <= yy < H and 0 <= xx < W:
                    out[:, :, h, w] += wt * feat[:, :, yy, xx]
    return out


if __name__ == "__main__":
    B, C, H, W = 2, 4, 16, 16
    key = jax.random.PRNGKey(0)
    k_feat, k_box0, k_box1 = jax.random.split(key, 3)
    feat = jax.random.normal(k_feat, (B, C, H, W), dtype=jnp.float32)

    # Small deterministic "gt boxes" as (N, 7) arrays [x, y, z, dx, dy, dz, yaw]
    gt_bboxes_3d = [
        np.asarray(jax.random.uniform(k_box0, (5, 7), minval=-40.0, maxval=40.0)),
        np.asarray(jax.random.uniform(k_box1, (3, 7), minval=-40.0, maxval=40.0)),
    ]
    gt_labels_3d = [np.arange(5, dtype=np.int64), np.arange(3, dtype=np.int64)]

    # prob=1.0 guarantees the rotation (kernel) branch runs; training mode on.
    module = BEVRandomRotate(prob=1.0, max_rotate_degree=22.5)
    module.training = True

    rotated_bf16 = module.forward(feat, gt_bboxes_3d, gt_labels_3d, seed=0)
    rotated_bf16 = jax.block_until_ready(rotated_bf16)

    # --- correctness check against a pure-numpy grid_sample reference ---
    rng = random.Random(0)
    _ = rng.uniform(0, 1)
    deg = rng.uniform(-22.5, 22.5)
    rot3 = BEVRandomRotate._get_rotation_matrix(deg)
    cos, sin = float(rot3[0, 0]), float(rot3[1, 0])
    xs = 2.0 * (np.arange(W, dtype=np.float32) + 0.5) / W - 1.0
    ys = 2.0 * (np.arange(H, dtype=np.float32) + 0.5) / H - 1.0
    xn = np.broadcast_to(xs[None, :], (H, W))
    yn = np.broadcast_to(ys[:, None], (H, W))
    ix_ref = ((cos * xn - sin * yn + 1.0) * W - 1.0) / 2.0
    iy_ref = ((sin * xn + cos * yn + 1.0) * H - 1.0) / 2.0
    ref = _grid_sample_ref(np.asarray(feat), ix_ref, iy_ref)

    # Default bf16 MXU path: loose tolerance (bf16 mantissa on feat + weights).
    np.testing.assert_allclose(np.asarray(rotated_bf16), ref, rtol=5e-2, atol=5e-2)

    # f32 MXU path: tight check of the sampling/coordinate logic.
    rotated_f32 = jax.block_until_ready(
        pallas_grid_sample(feat, cos, sin, compute_dtype=jnp.float32))
    np.testing.assert_allclose(np.asarray(rotated_f32), ref, rtol=1e-4, atol=1e-5)

    print("KERNEL_OK")
</pallas_src>

<mosaic_0001>
module attributes {stable_mosaic.version = 11 : i64} {
  func.func @_bev_grid_sample_kernel(%arg0: i32, %arg1: i32, %arg2: memref<2xf32, #tpu.memory_space<smem>>, %arg3: memref<8x256xbf16, #tpu.memory_space<vmem>>, %arg4: memref<8x256xf32, #tpu.memory_space<vmem>>, %arg5: memref<256x256xbf16, #tpu.memory_space<vmem>>) attributes {dimension_semantics = [#tpu.dimension_semantics<parallel>, #tpu.dimension_semantics<arbitrary>], iteration_bounds = array<i64: 1, 1>, scalar_prefetch = 0 : i64, scratch_operands = 1 : i64, tpu.core_type = #tpu.core_type<tc>, window_params = [{transform_indices = @transform_0, window_bounds = array<i64: 2>}, {transform_indices = @transform_1, window_bounds = array<i64: 8, 256>}, {transform_indices = @transform_2, window_bounds = array<i64: 8, 256>}]} {
    %c0_i32 = arith.constant 0 : i32
    %0 = arith.cmpi eq, %arg1, %c0_i32 : i32
    %1 = arith.extui %0 : i1 to i32
    %c0_i32_0 = arith.constant 0 : i32
    %2 = arith.cmpi ne, %1, %c0_i32_0 : i32
    scf.if %2 {
      %c0_6 = arith.constant 0 : index
      %7 = memref.load %arg2[%c0_6] : memref<2xf32, #tpu.memory_space<smem>>
      %c1 = arith.constant 1 : index
      %8 = memref.load %arg2[%c1] : memref<2xf32, #tpu.memory_space<smem>>
      %9 = tpu.iota {dimensions = array<i32: 1>} : vector<1x256xi32>
      %c256_i32 = arith.constant 256 : i32
      %10 = arith.muli %arg0, %c256_i32 : i32
      %11 = vector.broadcast %10 : i32 to vector<1x256xi32>
      %12 = arith.addi %9, %11 : vector<1x256xi32>
      %13 = arith.sitofp %12 : vector<1x256xi32> to vector<1x256xf32>
      %cst_7 = arith.constant 5.000000e-01 : f32
      %14 = vector.broadcast %cst_7 : f32 to vector<1x256xf32>
      %15 = arith.addf %13, %14 : vector<1x256xf32>
      %cst_8 = arith.constant 6.250000e-02 : f32
      %16 = vector.broadcast %cst_8 : f32 to vector<1x256xf32>
      %17 = arith.mulf %15, %16 : vector<1x256xf32>
      %18 = math.floor %17 : vector<1x256xf32>
      %cst_9 = arith.constant 1.600000e+01 : f32
      %19 = vector.broadcast %cst_9 : f32 to vector<1x256xf32>
      %20 = arith.mulf %18, %19 : vector<1x256xf32>
      %21 = arith.subf %13, %20 : vector<1x256xf32>
      %cst_10 = arith.constant 0.000000e+00 : f32
      %22 = vector.broadcast %cst_10 : f32 to vector<1x256xf32>
      %23 = arith.cmpf olt, %21, %22 : vector<1x256xf32>
      %cst_11 = arith.constant 1.000000e+00 : f32
      %24 = vector.broadcast %cst_11 : f32 to vector<1x256xf32>
      %25 = arith.subf %18, %24 : vector<1x256xf32>
      %26 = arith.select %23, %25, %18 : vector<1x256xi1>, vector<1x256xf32>
      %cst_12 = arith.constant 1.600000e+01 : f32
      %27 = vector.broadcast %cst_12 : f32 to vector<1x256xf32>
      %28 = arith.cmpf oge, %21, %27 : vector<1x256xf32>
      %cst_13 = arith.constant 1.000000e+00 : f32
      %29 = vector.broadcast %cst_13 : f32 to vector<1x256xf32>
      %30 = arith.addf %26, %29 : vector<1x256xf32>
      %31 = arith.select %28, %30, %26 : vector<1x256xi1>, vector<1x256xf32>
      %cst_14 = arith.constant 1.600000e+01 : f32
      %32 = vector.broadcast %cst_14 : f32 to vector<1x256xf32>
      %33 = arith.mulf %31, %32 : vector<1x256xf32>
      %34 = arith.subf %13, %33 : vector<1x256xf32>
      %cst_15 = arith.constant 5.000000e-01 : f32
      %35 = vector.broadcast %cst_15 : f32 to vector<1x256xf32>
      %36 = arith.addf %34, %35 : vector<1x256xf32>
      %cst_16 = arith.constant 2.000000e+00 : f32
      %37 = vector.broadcast %cst_16 : f32 to vector<1x256xf32>
      %38 = arith.mulf %37, %36 : vector<1x256xf32>
      %cst_17 = arith.constant 1.600000e+01 : f32
      %39 = vector.broadcast %cst_17 : f32 to vector<1x256xf32>
      %40 = arith.divf %38, %39 : vector<1x256xf32>
      %cst_18 = arith.constant 1.000000e+00 : f32
      %41 = vector.broadcast %cst_18 : f32 to vector<1x256xf32>
      %42 = arith.subf %40, %41 : vector<1x256xf32>
      %cst_19 = arith.constant 5.000000e-01 : f32
      %43 = vector.broadcast %cst_19 : f32 to vector<1x256xf32>
      %44 = arith.addf %31, %43 : vector<1x256xf32>
      %cst_20 = arith.constant 2.000000e+00 : f32
      %45 = vector.broadcast %cst_20 : f32 to vector<1x256xf32>
      %46 = arith.mulf %45, %44 : vector<1x256xf32>
      %cst_21 = arith.constant 1.600000e+01 : f32
      %47 = vector.broadcast %cst_21 : f32 to vector<1x256xf32>
      %48 = arith.divf %46, %47 : vector<1x256xf32>
      %cst_22 = arith.constant 1.000000e+00 : f32
      %49 = vector.broadcast %cst_22 : f32 to vector<1x256xf32>
      %50 = arith.subf %48, %49 : vector<1x256xf32>
      %51 = vector.broadcast %7 : f32 to vector<1x256xf32>
      %52 = arith.mulf %51, %42 : vector<1x256xf32>
      %53 = vector.broadcast %8 : f32 to vector<1x256xf32>
      %54 = arith.mulf %53, %50 : vector<1x256xf32>
      %55 = arith.subf %52, %54 : vector<1x256xf32>
      %56 = vector.broadcast %8 : f32 to vector<1x256xf32>
      %57 = arith.mulf %56, %42 : vector<1x256xf32>
      %58 = vector.broadcast %7 : f32 to vector<1x256xf32>
      %59 = arith.mulf %58, %50 : vector<1x256xf32>
      %60 = arith.addf %57, %59 : vector<1x256xf32>
      %cst_23 = arith.constant 1.000000e+00 : f32
      %61 = vector.broadcast %cst_23 : f32 to vector<1x256xf32>
      %62 = arith.addf %55, %61 : vector<1x256xf32>
      %cst_24 = arith.constant 1.600000e+01 : f32
      %63 = vector.broadcast %cst_24 : f32 to vector<1x256xf32>
      %64 = arith.mulf %62, %63 : vector<1x256xf32>
      %cst_25 = arith.constant 1.000000e+00 : f32
      %65 = vector.broadcast %cst_25 : f32 to vector<1x256xf32>
      %66 = arith.subf %64, %65 : vector<1x256xf32>
      %cst_26 = arith.constant 5.000000e-01 : f32
      %67 = vector.broadcast %cst_26 : f32 to vector<1x256xf32>
      %68 = arith.mulf %66, %67 : vector<1x256xf32>
      %cst_27 = arith.constant 1.000000e+00 : f32
      %69 = vector.broadcast %cst_27 : f32 to vector<1x256xf32>
      %70 = arith.addf %60, %69 : vector<1x256xf32>
      %cst_28 = arith.constant 1.600000e+01 : f32
      %71 = vector.broadcast %cst_28 : f32 to vector<1x256xf32>
      %72 = arith.mulf %70, %71 : vector<1x256xf32>
      %cst_29 = arith.constant 1.000000e+00 : f32
      %73 = vector.broadcast %cst_29 : f32 to vector<1x256xf32>
      %74 = arith.subf %72, %73 : vector<1x256xf32>
      %cst_30 = arith.constant 5.000000e-01 : f32
      %75 = vector.broadcast %cst_30 : f32 to vector<1x256xf32>
      %76 = arith.mulf %74, %75 : vector<1x256xf32>
      %77 = math.floor %68 : vector<1x256xf32>
      %78 = math.floor %76 : vector<1x256xf32>
      %79 = arith.subf %68, %77 : vector<1x256xf32>
      %80 = arith.subf %76, %78 : vector<1x256xf32>
      %cst_31 = arith.constant 1.000000e+00 : f32
      %81 = vector.broadcast %cst_31 : f32 to vector<1x256xf32>
      %82 = arith.subf %81, %79 : vector<1x256xf32>
      %cst_32 = arith.constant 1.000000e+00 : f32
      %83 = vector.broadcast %cst_32 : f32 to vector<1x256xf32>
      %84 = arith.subf %83, %80 : vector<1x256xf32>
      %85 = arith.fptosi %77 : vector<1x256xf32> to vector<1x256xi32>
      %86 = arith.fptosi %78 : vector<1x256xf32> to vector<1x256xi32>
      %c1_i32 = arith.constant 1 : i32
      %87 = vector.broadcast %c1_i32 : i32 to vector<1x256xi32>
      %88 = arith.addi %85, %87 : vector<1x256xi32>
      %c1_i32_33 = arith.constant 1 : i32
      %89 = vector.broadcast %c1_i32_33 : i32 to vector<1x256xi32>
      %90 = arith.addi %86, %89 : vector<1x256xi32>
      %c0_i32_34 = arith.constant 0 : i32
      %91 = vector.broadcast %c0_i32_34 : i32 to vector<1x256xi32>
      %92 = arith.cmpi sge, %85, %91 : vector<1x256xi32>
      %c16_i32 = arith.constant 16 : i32
      %93 = vector.broadcast %c16_i32 : i32 to vector<1x256xi32>
      %94 = arith.cmpi slt, %85, %93 : vector<1x256xi32>
      %95 = arith.andi %92, %94 : vector<1x256xi1>
      %c0_i32_35 = arith.constant 0 : i32
      %96 = vector.broadcast %c0_i32_35 : i32 to vector<1x256xi32>
      %97 = arith.cmpi sge, %88, %96 : vector<1x256xi32>
      %c16_i32_36 = arith.constant 16 : i32
      %98 = vector.broadcast %c16_i32_36 : i32 to vector<1x256xi32>
      %99 = arith.cmpi slt, %88, %98 : vector<1x256xi32>
      %100 = arith.andi %97, %99 : vector<1x256xi1>
      %c0_i32_37 = arith.constant 0 : i32
      %101 = vector.broadcast %c0_i32_37 : i32 to vector<1x256xi32>
      %102 = arith.cmpi sge, %86, %101 : vector<1x256xi32>
      %c16_i32_38 = arith.constant 16 : i32
      %103 = vector.broadcast %c16_i32_38 : i32 to vector<1x256xi32>
      %104 = arith.cmpi slt, %86, %103 : vector<1x256xi32>
      %105 = arith.andi %102, %104 : vector<1x256xi1>
      %c0_i32_39 = arith.constant 0 : i32
      %106 = vector.broadcast %c0_i32_39 : i32 to vector<1x256xi32>
      %107 = arith.cmpi sge, %90, %106 : vector<1x256xi32>
      %c16_i32_40 = arith.constant 16 : i32
      %108 = vector.broadcast %c16_i32_40 : i32 to vector<1x256xi32>
      %109 = arith.cmpi slt, %90, %108 : vector<1x256xi32>
      %110 = arith.andi %107, %109 : vector<1x256xi1>
      %111 = arith.andi %105, %95 : vector<1x256xi1>
      %112 = arith.mulf %84, %82 : vector<1x256xf32>
      %cst_41 = arith.constant 0.000000e+00 : f32
      %113 = vector.broadcast %cst_41 : f32 to vector<1x256xf32>
      %114 = arith.select %111, %112, %113 : vector<1x256xi1>, vector<1x256xf32>
      %115 = arith.andi %105, %100 : vector<1x256xi1>
      %116 = arith.mulf %84, %79 : vector<1x256xf32>
      %cst_42 = arith.constant 0.000000e+00 : f32
      %117 = vector.broadcast %cst_42 : f32 to vector<1x256xf32>
      %118 = arith.select %115, %116, %117 : vector<1x256xi1>, vector<1x256xf32>
      %119 = arith.andi %110, %95 : vector<1x256xi1>
      %120 = arith.mulf %80, %82 : vector<1x256xf32>
      %cst_43 = arith.constant 0.000000e+00 : f32
      %121 = vector.broadcast %cst_43 : f32 to vector<1x256xf32>
      %122 = arith.select %119, %120, %121 : vector<1x256xi1>, vector<1x256xf32>
      %123 = arith.andi %110, %100 : vector<1x256xi1>
      %124 = arith.mulf %80, %79 : vector<1x256xf32>
      %cst_44 = arith.constant 0.000000e+00 : f32
      %125 = vector.broadcast %cst_44 : f32 to vector<1x256xf32>
      %126 = arith.select %123, %124, %125 : vector<1x256xi1>, vector<1x256xf32>
      %c16_i32_45 = arith.constant 16 : i32
      %127 = vector.broadcast %c16_i32_45 : i32 to vector<1x256xi32>
      %128 = arith.muli %86, %127 : vector<1x256xi32>
      %129 = arith.addi %128, %85 : vector<1x256xi32>
      %130 = tpu.iota {dimensions = array<i32: 0>} : vector<256x256xi32>
      %131 = vector.broadcast %129 : vector<1x256xi32> to vector<256x256xi32>
      %132 = arith.subi %130, %131 : vector<256x256xi32>
      %c0_i32_46 = arith.constant 0 : i32
      %133 = vector.broadcast %c0_i32_46 : i32 to vector<256x256xi32>
      %134 = arith.cmpi eq, %132, %133 : vector<256x256xi32>
      %cst_47 = arith.constant 0.000000e+00 : f32
      %135 = vector.shape_cast %114 : vector<1x256xf32> to vector<1x256xf32>
      %136 = vector.broadcast %135 : vector<1x256xf32> to vector<256x256xf32>
      %137 = vector.broadcast %cst_47 : f32 to vector<256x256xf32>
      %138 = arith.select %134, %136, %137 : vector<256x256xi1>, vector<256x256xf32>
      %c1_i32_48 = arith.constant 1 : i32
      %139 = vector.broadcast %c1_i32_48 : i32 to vector<256x256xi32>
      %140 = arith.cmpi eq, %132, %139 : vector<256x256xi32>
      %cst_49 = arith.constant 0.000000e+00 : f32
      %141 = vector.shape_cast %118 : vector<1x256xf32> to vector<1x256xf32>
      %142 = vector.broadcast %141 : vector<1x256xf32> to vector<256x256xf32>
      %143 = vector.broadcast %cst_49 : f32 to vector<256x256xf32>
      %144 = arith.select %140, %142, %143 : vector<256x256xi1>, vector<256x256xf32>
      %145 = arith.addf %138, %144 : vector<256x256xf32>
      %c16_i32_50 = arith.constant 16 : i32
      %146 = vector.broadcast %c16_i32_50 : i32 to vector<256x256xi32>
      %147 = arith.cmpi eq, %132, %146 : vector<256x256xi32>
      %cst_51 = arith.constant 0.000000e+00 : f32
      %148 = vector.shape_cast %122 : vector<1x256xf32> to vector<1x256xf32>
      %149 = vector.broadcast %148 : vector<1x256xf32> to vector<256x256xf32>
      %150 = vector.broadcast %cst_51 : f32 to vector<256x256xf32>
      %151 = arith.select %147, %149, %150 : vector<256x256xi1>, vector<256x256xf32>
      %152 = arith.addf %145, %151 : vector<256x256xf32>
      %c17_i32 = arith.constant 17 : i32
      %153 = vector.broadcast %c17_i32 : i32 to vector<256x256xi32>
      %154 = arith.cmpi eq, %132, %153 : vector<256x256xi32>
      %cst_52 = arith.constant 0.000000e+00 : f32
      %155 = vector.shape_cast %126 : vector<1x256xf32> to vector<1x256xf32>
      %156 = vector.broadcast %155 : vector<1x256xf32> to vector<256x256xf32>
      %157 = vector.broadcast %cst_52 : f32 to vector<256x256xf32>
      %158 = arith.select %154, %156, %157 : vector<256x256xi1>, vector<256x256xf32>
      %159 = arith.addf %152, %158 : vector<256x256xf32>
      %160 = arith.truncf %159 : vector<256x256xf32> to vector<256x256xbf16>
      %c0_53 = arith.constant 0 : index
      %c0_54 = arith.constant 0 : index
      %161 = vector.load %arg5[%c0_53, %c0_54] : memref<256x256xbf16, #tpu.memory_space<vmem>>, vector<256x256xbf16>
      tpu.vector_store %arg5[%c0_53, %c0_54], %160 {strides = array<i32>} : memref<256x256xbf16, #tpu.memory_space<vmem>>, vector<256x256xbf16>,
    } else {
    }
    %c0 = arith.constant 0 : index
    %c0_1 = arith.constant 0 : index
    %3 = vector.load %arg3[%c0, %c0_1] : memref<8x256xbf16, #tpu.memory_space<vmem>>, vector<8x256xbf16>
    %c0_2 = arith.constant 0 : index
    %c0_3 = arith.constant 0 : index
    %4 = vector.load %arg5[%c0_2, %c0_3] : memref<256x256xbf16, #tpu.memory_space<vmem>>, vector<256x256xbf16>
    %cst = arith.constant dense<0.000000e+00> : vector<8x256xf32>
    %5 = tpu.matmul %3, %4, %cst {dimension_numbers = #tpu.dot_dimension_numbers<[1], [0], [0], [1], [0, 0, 1, 1], [], []>} : vector<8x256xbf16>, vector<256x256xbf16>, vector<8x256xf32> -> vector<8x256xf32>
    %c0_4 = arith.constant 0 : index
    %c0_5 = arith.constant 0 : index
    %6 = vector.load %arg4[%c0_4, %c0_5] : memref<8x256xf32, #tpu.memory_space<vmem>>, vector<8x256xf32>
    tpu.vector_store %arg4[%c0_4, %c0_5], %5 {strides = array<i32>} : memref<8x256xf32, #tpu.memory_space<vmem>>, vector<8x256xf32>,
    return
  }
  func.func @transform_0(%arg0: i32, %arg1: i32) -> i32 {
    %c0_i32 = arith.constant 0 : i32
    %c0_i32_0 = arith.constant 0 : i32
    return %c0_i32 : i32
  }
  func.func @transform_1(%arg0: i32, %arg1: i32) -> (i32, i32) {
    %c0_i32 = arith.constant 0 : i32
    %c0_i32_0 = arith.constant 0 : i32
    return %arg1, %c0_i32 : i32, i32
  }
  func.func @transform_2(%arg0: i32, %arg1: i32) -> (i32, i32) {
    %c0_i32 = arith.constant 0 : i32
    return %arg1, %arg0 : i32, i32
  }
}

</mosaic_0001>

<llo_original>
// kernel: tpu_custom_call.1
$region0: #{tpu_custom_call.1}
  #allocation0 [shape = 'u32[]', space=smem, size = 0x4, offset = 0x4, fixed_abs, tag = 'smem constant byte address 0x4 - core index']
  #allocation1 [shape = 'u32[144,128]{1,0:T(1,128)}', space=vmem, size = 0x12000, scoped, tag = 'internal scratch']
  #allocation2 [shape = 'bf16[256,256]{1,0:T(8,128)(2,1)}', space=vmem, size = 0x20000, scoped, tag = 'scratch operand']
  %s0 = inlined_call_operand.hbm [shape: f32[2], index: 0, kind: input, shape index: {}]
  %s1 = inlined_call_operand.hbm [shape: bf16[8,256], index: 1, kind: input, shape index: {}]
  %s2 = inlined_call_operand.hbm [shape: f32[8,256], index: 2, kind: output, shape index: {}]
  %s3 = sld [smem:[#allocation0]]
  $region30: #{tpu_custom_call.1} parent=0
    _
  %s5 = ssub.s32 1, %s3
  %s6 = scalar_select 0, %s5, %s3
  $region1: #{tpu_custom_call.1} parent=0
    #allocation3 [shape = 'u8[512]{0}', space=smem, size = 0x200, scoped, tag = 'input window, operand 0, single buffered']
    #allocation4 [shape = 's32[1]{0}', space=sflag, size = 0x4, scoped, tag = 'scoped memory for tpu_custom_call.1']
    #allocation5 [shape = 's32[1]{0}', space=sflag, size = 0x4, scoped, tag = 'scoped memory for tpu_custom_call.1']
    #allocation6 [shape = 's32[1]{0}', space=sflag, size = 0x4, scoped, tag = 'scoped memory for tpu_custom_call.1']
    #allocation7 [shape = 'u8[4096]{0}', space=vmem, size = 0x1000, scoped, tag = 'input window, operand 1, single buffered']
    #allocation8 [shape = 'u8[8192]{0}', space=vmem, size = 0x2000, scoped, tag = 'output window, operand 0, single buffered']
    %7 = vsyncpa [#allocation6], 0
    %8 = vsyncpa [#allocation4], 0
    %9 = vsyncpa [#allocation5], 0
    // Predicated region
    $region2: #{tpu_custom_call.1} parent=1 // pred_check
      _
    $region3: #{tpu_custom_call.1} parent=1 // pred_check_branch
      %11 = sbr.rel (0) target = $region5
    $region4: #{tpu_custom_call.1} parent=1 // pred_region
      %s13 = ssub.s32 16, 16
      %14 = vsyncadd [#allocation6], %s13
      %17 = dma.hbm_to_smem %s0, 16, [#allocation3], [#allocation6]
    $region5: #{tpu_custom_call.1} parent=1 // pred_fallthru
      _
    // Predicated region
    $region6: #{tpu_custom_call.1} parent=1 // pred_check
      _
    $region7: #{tpu_custom_call.1} parent=1 // pred_check_branch
      %19 = sbr.rel (0) target = $region9
    $region8: #{tpu_custom_call.1} parent=1 // pred_region
      %s21 = ssub.s32 128, 128
      %22 = vsyncadd [#allocation4], %s21
      %s24 = sshll.u32 [#allocation7], 4
      %s25 = int_to_ptr.vmem [resolvable:$true] %s24
      %27 = dma.hbm_to_vmem [thread:$0]  %s1, 128, %s25, [#allocation4]
    $region9: #{tpu_custom_call.1} parent=1 // pred_fallthru
      _
    // Predicated region
    $region10: #{tpu_custom_call.1} parent=1 // pred_check
      _
    $region11: #{tpu_custom_call.1} parent=1 // pred_check_branch
      %29 = sbr.rel (0) target = $region13
    $region12: #{tpu_custom_call.1} parent=1 // pred_region
      %30 = dma.done [#allocation6], 16
    $region13: #{tpu_custom_call.1} parent=1 // pred_fallthru
      _
    // Predicated region
    $region14: #{tpu_custom_call.1} parent=1 // pred_check
      _
    $region15: #{tpu_custom_call.1} parent=1 // pred_check_branch
      %32 = sbr.rel (0) target = $region17
    $region16: #{tpu_custom_call.1} parent=1 // pred_region
      %33 = dma.done [#allocation4], 128
    $region17: #{tpu_custom_call.1} parent=1 // pred_fallthru
      _
    %34 = sfence
    %p35 = scmp.eq.s32.totalorder 0, 0
    // Predicated region
    $region18: #{tpu_custom_call.1} parent=1 // pred_check
      %p36 = pneg %p35
    $region19: #{tpu_custom_call.1} parent=1 // pred_check_branch
      %38 = sbr.rel (%p36) target = $region21
    $region20: #{tpu_custom_call.1} parent=1 // pred_region
      %s39 = sld [smem:[#allocation3]]
      %s40 = sld [smem:[#allocation3 + $0x1]]
      %v41 = vlaneseq
      %v42 = vand.u32 %v41, 127
      %v43 = vadd.s32 %v42, 128
      %s44 = smul.u32 0, 256
      %v45 = vstv %s44
      %v46 = vadd.s32 %v42, %v45
      %v47 = vadd.s32 %v43, %v45
      %v48 = vcvt.s32.f32 %v46
      %v49 = vcvt.s32.f32 %v47
      %v50 = vadd.f32 %v48, 0.5
      %v51 = vadd.f32 %v49, 0.5
      %v52 = vmul.f32 %v50, 0.0625
      %v53 = vmul.f32 %v51, 0.0625
      %v54 = vfloor.f32 %v52
      %v55 = vfloor.f32 %v53
      %v56 = vmul.f32 %v54, 16.0
      %v57 = vmul.f32 %v55, 16.0
      %v58 = vsub.f32 %v48, %v56
      %v59 = vsub.f32 %v49, %v57
      %vm60 = vcmp.lt.f32.partialorder %v58, 0.0
      %vm61 = vcmp.lt.f32.partialorder %v59, 0.0
      %v62 = vsub.f32 %v54, 1.0
      %v63 = vsub.f32 %v55, 1.0
      %v64 = vsel %vm60, %v62, %v54
      %v65 = vsel %vm61, %v63, %v55
      %vm66 = vcmp.ge.f32.partialorder %v58, 16.0
      %vm67 = vcmp.ge.f32.partialorder %v59, 16.0
      %v68 = vadd.f32 %v64, 1.0
      %v69 = vadd.f32 %v65, 1.0
      %v70 = vsel %vm66, %v68, %v64
      %v71 = vsel %vm67, %v69, %v65
      %v72 = vmul.f32 %v70, 16.0
      %v73 = vmul.f32 %v71, 16.0
      %v74 = vsub.f32 %v48, %v72
      %v75 = vsub.f32 %v49, %v73
      %v76 = vadd.f32 %v74, 0.5
      %v77 = vadd.f32 %v75, 0.5
      %v78 = vmul.f32 %v76, 2.0
      %v79 = vmul.f32 %v77, 2.0
      %v80 = vrcp.pop 16.0
      %v81 = vmul.f32 %v78, %v80
      %v82 = vmul.f32 %v79, %v80
      %v83 = vsub.f32 %v81, 1.0
      %v84 = vsub.f32 %v82, 1.0
      %v85 = vadd.f32 %v70, 0.5
      %v86 = vadd.f32 %v71, 0.5
      %v87 = vmul.f32 %v85, 2.0
      %v88 = vmul.f32 %v86, 2.0
      %v89 = vmul.f32 %v87, %v80
      %v90 = vmul.f32 %v88, %v80
      %v91 = vsub.f32 %v89, 1.0
      %v92 = vsub.f32 %v90, 1.0
      %v93 = vstv %s39
      %v94 = vmul.f32 %v93, %v83
      %v95 = vmul.f32 %v93, %v84
      %v96 = vstv %s40
      %v97 = vmul.f32 %v96, %v91
      %v98 = vmul.f32 %v96, %v92
      %v99 = vsub.f32 %v94, %v97
      %v100 = vsub.f32 %v95, %v98
      %v101 = vmul.f32 %v96, %v83
      %v102 = vmul.f32 %v96, %v84
      %v103 = vmul.f32 %v93, %v91
      %v104 = vmul.f32 %v93, %v92
      %v105 = vadd.f32 %v101, %v103
      %v106 = vadd.f32 %v102, %v104
      %v107 = vadd.f32 %v99, 1.0
      %v108 = vadd.f32 %v100, 1.0
      %v109 = vmul.f32 %v107, 16.0
      %v110 = vmul.f32 %v108, 16.0
      %v111 = vsub.f32 %v109, 1.0
      %v112 = vsub.f32 %v110, 1.0
      %v113 = vmul.f32 %v111, 0.5
      %v114 = vmul.f32 %v112, 0.5
      %v115 = vadd.f32 %v105, 1.0
      %v116 = vadd.f32 %v106, 1.0
      %v117 = vmul.f32 %v115, 16.0
      %v118 = vmul.f32 %v116, 16.0
      %v119 = vsub.f32 %v117, 1.0
      %v120 = vsub.f32 %v118, 1.0
      %v121 = vmul.f32 %v119, 0.5
      %v122 = vmul.f32 %v120, 0.5
      %v123 = vfloor.f32 %v113
      %v124 = vfloor.f32 %v114
      %v125 = vfloor.f32 %v121
      %v126 = vfloor.f32 %v122
      %v127 = vsub.f32 %v113, %v123
      %v128 = vsub.f32 %v114, %v124
      %v129 = vsub.f32 %v121, %v125
      %v130 = vsub.f32 %v122, %v126
      %v131 = vsub.f32 1.0, %v127
      %v132 = vsub.f32 1.0, %v128
      %v133 = vsub.f32 1.0, %v129
      %v134 = vsub.f32 1.0, %v130
      %v135 = vcvt.f32.s32.to.zero.pseudo %v123
      %v136 = vcvt.f32.s32.to.zero.pseudo %v124
      %v137 = vcvt.f32.s32.to.zero.pseudo %v125
      %v138 = vcvt.f32.s32.to.zero.pseudo %v126
      %v139 = vadd.s32 %v135, 1
      %v140 = vadd.s32 %v136, 1
      %v141 = vadd.s32 %v137, 1
      %v142 = vadd.s32 %v138, 1
      %vm143 = vcmp.ge.s32.totalorder %v135, 0
      %vm144 = vcmp.ge.s32.totalorder %v136, 0
      %vm145 = vcmp.lt.s32.totalorder %v135, 16
      %vm146 = vcmp.lt.s32.totalorder %v136, 16
      %vm147 = vmand %vm143, %vm145
      %vm148 = vmand %vm144, %vm146
      %vm149 = vcmp.ge.s32.totalorder %v139, 0
      %vm150 = vcmp.ge.s32.totalorder %v140, 0
      %vm151 = vcmp.lt.s32.totalorder %v139, 16
      %vm152 = vcmp.lt.s32.totalorder %v140, 16
      %vm153 = vmand %vm149, %vm151
      %vm154 = vmand %vm150, %vm152
      %vm155 = vcmp.ge.s32.totalorder %v137, 0
      %vm156 = vcmp.ge.s32.totalorder %v138, 0
      %vm157 = vcmp.lt.s32.totalorder %v137, 16
      %vm158 = vcmp.lt.s32.totalorder %v138, 16
      %vm159 = vmand %vm155, %vm157
      %vm160 = vmand %vm156, %vm158
      %vm161 = vcmp.ge.s32.totalorder %v141, 0
      %vm162 = vcmp.ge.s32.totalorder %v142, 0
      %vm163 = vcmp.lt.s32.totalorder %v141, 16
      %vm164 = vcmp.lt.s32.totalorder %v142, 16
      %vm165 = vmand %vm161, %vm163
      %vm166 = vmand %vm162, %vm164
      %vm167 = vmand %vm159, %vm147
      %vm168 = vmand %vm160, %vm148
      %v169 = vmul.f32 %v133, %v131
      %v170 = vmul.f32 %v134, %v132
      %v171 = vsel %vm167, %v169, 0.0
      %v172 = vsel %vm168, %v170, 0.0
      %vm173 = vmand %vm159, %vm153
      %vm174 = vmand %vm160, %vm154
      %v175 = vmul.f32 %v133, %v127
      %v176 = vmul.f32 %v134, %v128
      %v177 = vsel %vm173, %v175, 0.0
      %v178 = vsel %vm174, %v176, 0.0
      %vm179 = vmand %vm165, %vm147
      %vm180 = vmand %vm166, %vm148
      %v181 = vmul.f32 %v129, %v131
      %v182 = vmul.f32 %v130, %v132
      %v183 = vsel %vm179, %v181, 0.0
      %v184 = vsel %vm180, %v182, 0.0
      %vm185 = vmand %vm165, %vm153
      %vm186 = vmand %vm166, %vm154
      %v187 = vmul.f32 %v129, %v127
      %v188 = vmul.f32 %v130, %v128
      %v189 = vsel %vm185, %v187, 0.0
      %v190 = vsel %vm186, %v188, 0.0
      %v191 = vmul.u32 %v137, 16
      %v192 = vmul.u32 %v138, 16
      %v193 = vadd.s32 %v191, %v135
      %v194 = vadd.s32 %v192, %v136
      %v195 = vlaneseq
      %v196 = vshrl.u32 %v195, 7
      %v197 = vadd.s32 %v196, 8
      %v198 = vadd.s32 %v196, 16
      %v199 = vadd.s32 %v196, 24
      %v200 = vadd.s32 %v196, 32
      %v201 = vadd.s32 %v196, 40
      %v202 = vadd.s32 %v196, 48
      %v203 = vadd.s32 %v196, 56
      %v204 = vadd.s32 %v196, 64
      %v205 = vadd.s32 %v196, 72
      %v206 = vadd.s32 %v196, 80
      %v207 = vadd.s32 %v196, 88
      %v208 = vadd.s32 %v196, 96
      %v209 = vadd.s32 %v196, 104
      %v210 = vadd.s32 %v196, 112
      %v211 = vadd.s32 %v196, 120
      %v212 = vadd.s32 %v196, 128
      %v213 = vadd.s32 %v196, 136
      %v214 = vadd.s32 %v196, 144
      %v215 = vadd.s32 %v196, 152
      %v216 = vadd.s32 %v196, 160
      %v217 = vadd.s32 %v196, 168
      %v218 = vadd.s32 %v196, 176
      %v219 = vadd.s32 %v196, 184
      %v220 = vadd.s32 %v196, 192
      %v221 = vadd.s32 %v196, 200
      %v222 = vadd.s32 %v196, 208
      %v223 = vadd.s32 %v196, 216
      %v224 = vadd.s32 %v196, 224
      %v225 = vadd.s32 %v196, 232
      %v226 = vadd.s32 %v196, 240
      %v227 = vadd.s32 %v196, 248
      %v228 = vsub.s32 %v196, %v193
      %v229 = vsub.s32 %v196, %v194
      %v230 = vsub.s32 %v197, %v193
      %v231 = vsub.s32 %v197, %v194
      %v232 = vsub.s32 %v198, %v193
      %v233 = vsub.s32 %v198, %v194
      %v234 = vsub.s32 %v199, %v193
      %v235 = vsub.s32 %v199, %v194
      %v236 = vsub.s32 %v200, %v193
      %v237 = vsub.s32 %v200, %v194
      %v238 = vsub.s32 %v201, %v193
      %v239 = vsub.s32 %v201, %v194
      %v240 = vsub.s32 %v202, %v193
      %v241 = vsub.s32 %v202, %v194
      %v242 = vsub.s32 %v203, %v193
      %v243 = vsub.s32 %v203, %v194
      %v244 = vsub.s32 %v204, %v193
      %v245 = vsub.s32 %v204, %v194
      %v246 = vsub.s32 %v205, %v193
      %v247 = vsub.s32 %v205, %v194
      %v248 = vsub.s32 %v206, %v193
      %v249 = vsub.s32 %v206, %v194
      %v250 = vsub.s32 %v207, %v193
      %v251 = vsub.s32 %v207, %v194
      %v252 = vsub.s32 %v208, %v193
      %v253 = vsub.s32 %v208, %v194
      %v254 = vsub.s32 %v209, %v193
      %v255 = vsub.s32 %v209, %v194
      %v256 = vsub.s32 %v210, %v193
      %v257 = vsub.s32 %v210, %v194
      %v258 = vsub.s32 %v211, %v193
      %v259 = vsub.s32 %v211, %v194
      %v260 = vsub.s32 %v212, %v193
      %v261 = vsub.s32 %v212, %v194
      %v262 = vsub.s32 %v213, %v193
      %v263 = vsub.s32 %v213, %v194
      %v264 = vsub.s32 %v214, %v193
      %v265 = vsub.s32 %v214, %v194
      %v266 = vsub.s32 %v215, %v193
      %v267 = vsub.s32 %v215, %v194
      %v268 = vsub.s32 %v216, %v193
      %v269 = vsub.s32 %v216, %v194
      %v270 = vsub.s32 %v217, %v193
      %v271 = vsub.s32 %v217, %v194
      %v272 = vsub.s32 %v218, %v193
      %v273 = vsub.s32 %v218, %v194
      %v274 = vsub.s32 %v219, %v193
      %v275 = vsub.s32 %v219, %v194
      %v276 = vsub.s32 %v220, %v193
      %v277 = vsub.s32 %v220, %v194
      %v278 = vsub.s32 %v221, %v193
      %v279 = vsub.s32 %v221, %v194
      %v280 = vsub.s32 %v222, %v193
      %v281 = vsub.s32 %v222, %v194
      %v282 = vsub.s32 %v223, %v193
      %v283 = vsub.s32 %v223, %v194
      %v284 = vsub.s32 %v224, %v193
      %v285 = vsub.s32 %v224, %v194
      %v286 = vsub.s32 %v225, %v193
      %v287 = vsub.s32 %v225, %v194
      %v288 = vsub.s32 %v226, %v193
      %v289 = vsub.s32 %v226, %v194
      %v290 = vsub.s32 %v227, %v193
      %v291 = vsub.s32 %v227, %v194
      %vm292 = vcmp.eq.s32.totalorder %v228, 0
      %vm293 = vcmp.eq.s32.totalorder %v229, 0
      %vm294 = vcmp.eq.s32.totalorder %v230, 0
      %vm295 = vcmp.eq.s32.totalorder %v231, 0
      %vm296 = vcmp.eq.s32.totalorder %v232, 0
      %vm297 = vcmp.eq.s32.totalorder %v233, 0
      %vm298 = vcmp.eq.s32.totalorder %v234, 0
      %vm299 = vcmp.eq.s32.totalorder %v235, 0
      %vm300 = vcmp.eq.s32.totalorder %v236, 0
      %vm301 = vcmp.eq.s32.totalorder %v237, 0
      %vm302 = vcmp.eq.s32.totalorder %v238, 0
      %vm303 = vcmp.eq.s32.totalorder %v239, 0
      %vm304 = vcmp.eq.s32.totalorder %v240, 0
      %vm305 = vcmp.eq.s32.totalorder %v241, 0
      %vm306 = vcmp.eq.s32.totalorder %v242, 0
      %vm307 = vcmp.eq.s32.totalorder %v243, 0
      %vm308 = vcmp.eq.s32.totalorder %v244, 0
      %vm309 = vcmp.eq.s32.totalorder %v245, 0
      %vm310 = vcmp.eq.s32.totalorder %v246, 0
      %vm311 = vcmp.eq.s32.totalorder %v247, 0
      %vm312 = vcmp.eq.s32.totalorder %v248, 0
      %vm313 = vcmp.eq.s32.totalorder %v249, 0
      %vm314 = vcmp.eq.s32.totalorder %v250, 0
      %vm315 = vcmp.eq.s32.totalorder %v251, 0
      %vm316 = vcmp.eq.s32.totalorder %v252, 0
      %vm317 = vcmp.eq.s32.totalorder %v253, 0
      %vm318 = vcmp.eq.s32.totalorder %v254, 0
      %vm319 = vcmp.eq.s32.totalorder %v255, 0
      %vm320 = vcmp.eq.s32.totalorder %v256, 0
      %vm321 = vcmp.eq.s32.totalorder %v257, 0
      %vm322 = vcmp.eq.s32.totalorder %v258, 0
      %vm323 = vcmp.eq.s32.totalorder %v259, 0
      %vm324 = vcmp.eq.s32.totalorder %v260, 0
      %vm325 = vcmp.eq.s32.totalorder %v261, 0
      %vm326 = vcmp.eq.s32.totalorder %v262, 0
      %vm327 = vcmp.eq.s32.totalorder %v263, 0
      %vm328 = vcmp.eq.s32.totalorder %v264, 0
      %vm329 = vcmp.eq.s32.totalorder %v265, 0
      %vm330 = vcmp.eq.s32.totalorder %v266, 0
      %vm331 = vcmp.eq.s32.totalorder %v267, 0
      %vm332 = vcmp.eq.s32.totalorder %v268, 0
      %vm333 = vcmp.eq.s32.totalorder %v269, 0
      %vm334 = vcmp.eq.s32.totalorder %v270, 0
      %vm335 = vcmp.eq.s32.totalorder %v271, 0
      %vm336 = vcmp.eq.s32.totalorder %v272, 0
      %vm337 = vcmp.eq.s32.totalorder %v273, 0
      %vm338 = vcmp.eq.s32.totalorder %v274, 0
      %vm339 = vcmp.eq.s32.totalorder %v275, 0
      %vm340 = vcmp.eq.s32.totalorder %v276, 0
      %vm341 = vcmp.eq.s32.totalorder %v277, 0
      %vm342 = vcmp.eq.s32.totalorder %v278, 0
      %vm343 = vcmp.eq.s32.totalorder %v279, 0
      %vm344 = vcmp.eq.s32.totalorder %v280, 0
      %vm345 = vcmp.eq.s32.totalorder %v281, 0
      %vm346 = vcmp.eq.s32.totalorder %v282, 0
      %vm347 = vcmp.eq.s32.totalorder %v283, 0
      %vm348 = vcmp.eq.s32.totalorder %v284, 0
      %vm349 = vcmp.eq.s32.totalorder %v285, 0
      %vm350 = vcmp.eq.s32.totalorder %v286, 0
      %vm351 = vcmp.eq.s32.totalorder %v287, 0
      %vm352 = vcmp.eq.s32.totalorder %v288, 0
      %vm353 = vcmp.eq.s32.totalorder %v289, 0
      %vm354 = vcmp.eq.s32.totalorder %v290, 0
      %vm355 = vcmp.eq.s32.totalorder %v291, 0
      %v356 = vsel %vm292, %v171, 0.0
      %v357 = vsel %vm293, %v172, 0.0
      %v358 = vsel %vm294, %v171, 0.0
      %v359 = vsel %vm295, %v172, 0.0
      %v360 = vsel %vm296, %v171, 0.0
      %v361 = vsel %vm297, %v172, 0.0
      %v362 = vsel %vm298, %v171, 0.0
      %v363 = vsel %vm299, %v172, 0.0
      %v364 = vsel %vm300, %v171, 0.0
      %v365 = vsel %vm301, %v172, 0.0
      %v366 = vsel %vm302, %v171, 0.0
      %v367 = vsel %vm303, %v172, 0.0
      %v368 = vsel %vm304, %v171, 0.0
      %v369 = vsel %vm305, %v172, 0.0
      %v370 = vsel %vm306, %v171, 0.0
      %v371 = vsel %vm307, %v172, 0.0
      %v372 = vsel %vm308, %v171, 0.0
      %v373 = vsel %vm309, %v172, 0.0
      %v374 = vsel %vm310, %v171, 0.0
      %v375 = vsel %vm311, %v172, 0.0
      %v376 = vsel %vm312, %v171, 0.0
      %v377 = vsel %vm313, %v172, 0.0
      %v378 = vsel %vm314, %v171, 0.0
      %v379 = vsel %vm315, %v172, 0.0
      %v380 = vsel %vm316, %v171, 0.0
      %v381 = vsel %vm317, %v172, 0.0
      %v382 = vsel %vm318, %v171, 0.0
      %v383 = vsel %vm319, %v172, 0.0
      %v384 = vsel %vm320, %v171, 0.0
      %v385 = vsel %vm321, %v172, 0.0
      %v386 = vsel %vm322, %v171, 0.0
      %v387 = vsel %vm323, %v172, 0.0
      %v388 = vsel %vm324, %v171, 0.0
      %v389 = vsel %vm325, %v172, 0.0
      %v390 = vsel %vm326, %v171, 0.0
      %v391 = vsel %vm327, %v172, 0.0
      %v392 = vsel %vm328, %v171, 0.0
      %v393 = vsel %vm329, %v172, 0.0
      %v394 = vsel %vm330, %v171, 0.0
      %v395 = vsel %vm331, %v172, 0.0
      %v396 = vsel %vm332, %v171, 0.0
      %v397 = vsel %vm333, %v172, 0.0
      %v398 = vsel %vm334, %v171, 0.0
      %v399 = vsel %vm335, %v172, 0.0
      %v400 = vsel %vm336, %v171, 0.0
      %v401 = vsel %vm337, %v172, 0.0
      %v402 = vsel %vm338, %v171, 0.0
      %v403 = vsel %vm339, %v172, 0.0
      %v404 = vsel %vm340, %v171, 0.0
      %v405 = vsel %vm341, %v172, 0.0
      %v406 = vsel %vm342, %v171, 0.0
      %v407 = vsel %vm343, %v172, 0.0
      %v408 = vsel %vm344, %v171, 0.0
      %v409 = vsel %vm345, %v172, 0.0
      %v410 = vsel %vm346, %v171, 0.0
      %v411 = vsel %vm347, %v172, 0.0
      %v412 = vsel %vm348, %v171, 0.0
      %v413 = vsel %vm349, %v172, 0.0
      %v414 = vsel %vm350, %v171, 0.0
      %v415 = vsel %vm351, %v172, 0.0
      %v416 = vsel %vm352, %v171, 0.0
      %v417 = vsel %vm353, %v172, 0.0
      %v418 = vsel %vm354, %v171, 0.0
      %v419 = vsel %vm355, %v172, 0.0
      %vm420 = vcmp.eq.s32.totalorder %v228, 1
      %vm421 = vcmp.eq.s32.totalorder %v229, 1
      %vm422 = vcmp.eq.s32.totalorder %v230, 1
      %vm423 = vcmp.eq.s32.totalorder %v231, 1
      %vm424 = vcmp.eq.s32.totalorder %v232, 1
      %vm425 = vcmp.eq.s32.totalorder %v233, 1
      %vm426 = vcmp.eq.s32.totalorder %v234, 1
      %vm427 = vcmp.eq.s32.totalorder %v235, 1
      %vm428 = vcmp.eq.s32.totalorder %v236, 1
      %vm429 = vcmp.eq.s32.totalorder %v237, 1
      %vm430 = vcmp.eq.s32.totalorder %v238, 1
      %vm431 = vcmp.eq.s32.totalorder %v239, 1
      %vm432 = vcmp.eq.s32.totalorder %v240, 1
      %vm433 = vcmp.eq.s32.totalorder %v241, 1
      %vm434 = vcmp.eq.s32.totalorder %v242, 1
      %vm435 = vcmp.eq.s32.totalorder %v243, 1
      %vm436 = vcmp.eq.s32.totalorder %v244, 1
      %vm437 = vcmp.eq.s32.totalorder %v245, 1
      %vm438 = vcmp.eq.s32.totalorder %v246, 1
      %vm439 = vcmp.eq.s32.totalorder %v247, 1
      %vm440 = vcmp.eq.s32.totalorder %v248, 1
      %vm441 = vcmp.eq.s32.totalorder %v249, 1
      %vm442 = vcmp.eq.s32.totalorder %v250, 1
      %vm443 = vcmp.eq.s32.totalorder %v251, 1
      %vm444 = vcmp.eq.s32.totalorder %v252, 1
      %vm445 = vcmp.eq.s32.totalorder %v253, 1
      %vm446 = vcmp.eq.s32.totalorder %v254, 1
      %vm447 = vcmp.eq.s32.totalorder %v255, 1
      %vm448 = vcmp.eq.s32.totalorder %v256, 1
      %vm449 = vcmp.eq.s32.totalorder %v257, 1
      %vm450 = vcmp.eq.s32.totalorder %v258, 1
      %vm451 = vcmp.eq.s32.totalorder %v259, 1
      %vm452 = vcmp.eq.s32.totalorder %v260, 1
      %vm453 = vcmp.eq.s32.totalorder %v261, 1
      %vm454 = vcmp.eq.s32.totalorder %v262, 1
      %vm455 = vcmp.eq.s32.totalorder %v263, 1
      %vm456 = vcmp.eq.s32.totalorder %v264, 1
      %vm457 = vcmp.eq.s32.totalorder %v265, 1
      %vm458 = vcmp.eq.s32.totalorder %v266, 1
      %vm459 = vcmp.eq.s32.totalorder %v267, 1
      %vm460 = vcmp.eq.s32.totalorder %v268, 1
      %vm461 = vcmp.eq.s32.totalorder %v269, 1
      %vm462 = vcmp.eq.s32.totalorder %v270, 1
      %vm463 = vcmp.eq.s32.totalorder %v271, 1
      %vm464 = vcmp.eq.s32.totalorder %v272, 1
      %vm465 = vcmp.eq.s32.totalorder %v273, 1
      %vm466 = vcmp.eq.s32.totalorder %v274, 1
      %vm467 = vcmp.eq.s32.totalorder %v275, 1
      %vm468 = vcmp.eq.s32.totalorder %v276, 1
      %vm469 = vcmp.eq.s32.totalorder %v277, 1
      %vm470 = vcmp.eq.s32.totalorder %v278, 1
      %vm471 = vcmp.eq.s32.totalorder %v279, 1
      %vm472 = vcmp.eq.s32.totalorder %v280, 1
      %vm473 = vcmp.eq.s32.totalorder %v281, 1
      %vm474 = vcmp.eq.s32.totalorder %v282, 1
      %vm475 = vcmp.eq.s32.totalorder %v283, 1
      %vm476 = vcmp.eq.s32.totalorder %v284, 1
      %vm477 = vcmp.eq.s32.totalorder %v285, 1
      %vm478 = vcmp.eq.s32.totalorder %v286, 1
      %vm479 = vcmp.eq.s32.totalorder %v287, 1
      %vm480 = vcmp.eq.s32.totalorder %v288, 1
      %vm481 = vcmp.eq.s32.totalorder %v289, 1
      %vm482 = vcmp.eq.s32.totalorder %v290, 1
      %vm483 = vcmp.eq.s32.totalorder %v291, 1
      %v484 = vsel %vm420, %v177, 0.0
      %v485 = vsel %vm421, %v178, 0.0
      %v486 = vsel %vm422, %v177, 0.0
      %v487 = vsel %vm423, %v178, 0.0
      %v488 = vsel %vm424, %v177, 0.0
      %v489 = vsel %vm425, %v178, 0.0
      %v490 = vsel %vm426, %v177, 0.0
      %v491 = vsel %vm427, %v178, 0.0
      %v492 = vsel %vm428, %v177, 0.0
      %v493 = vsel %vm429, %v178, 0.0
      %v494 = vsel %vm430, %v177, 0.0
      %v495 = vsel %vm431, %v178, 0.0
      %v496 = vsel %vm432, %v177, 0.0
      %v497 = vsel %vm433, %v178, 0.0
      %v498 = vsel %vm434, %v177, 0.0
      %v499 = vsel %vm435, %v178, 0.0
      %v500 = vsel %vm436, %v177, 0.0
      %v501 = vsel %vm437, %v178, 0.0
      %v502 = vsel %vm438, %v177, 0.0
      %v503 = vsel %vm439, %v178, 0.0
      %v504 = vsel %vm440, %v177, 0.0
      %v505 = vsel %vm441, %v178, 0.0
      %v506 = vsel %vm442, %v177, 0.0
      %v507 = vsel %vm443, %v178, 0.0
      %v508 = vsel %vm444, %v177, 0.0
      %v509 = vsel %vm445, %v178, 0.0
      %v510 = vsel %vm446, %v177, 0.0
      %v511 = vsel %vm447, %v178, 0.0
      %v512 = vsel %vm448, %v177, 0.0
      %v513 = vsel %vm449, %v178, 0.0
      %v514 = vsel %vm450, %v177, 0.0
      %v515 = vsel %vm451, %v178, 0.0
      %v516 = vsel %vm452, %v177, 0.0
      %v517 = vsel %vm453, %v178, 0.0
      %v518 = vsel %vm454, %v177, 0.0
      %v519 = vsel %vm455, %v178, 0.0
      %v520 = vsel %vm456, %v177, 0.0
      %v521 = vsel %vm457, %v178, 0.0
      %v522 = vsel %vm458, %v177, 0.0
      %v523 = vsel %vm459, %v178, 0.0
      %v524 = vsel %vm460, %v177, 0.0
      %v525 = vsel %vm461, %v178, 0.0
      %v526 = vsel %vm462, %v177, 0.0
      %v527 = vsel %vm463, %v178, 0.0
      %v528 = vsel %vm464, %v177, 0.0
      %v529 = vsel %vm465, %v178, 0.0
      %v530 = vsel %vm466, %v177, 0.0
      %v531 = vsel %vm467, %v178, 0.0
      %v532 = vsel %vm468, %v177, 0.0
      %v533 = vsel %vm469, %v178, 0.0
      %v534 = vsel %vm470, %v177, 0.0
      %v535 = vsel %vm471, %v178, 0.0
      %v536 = vsel %vm472, %v177, 0.0
      %v537 = vsel %vm473, %v178, 0.0
      %v538 = vsel %vm474, %v177, 0.0
      %v539 = vsel %vm475, %v178, 0.0
      %v540 = vsel %vm476, %v177, 0.0
      %v541 = vsel %vm477, %v178, 0.0
      %v542 = vsel %vm478, %v177, 0.0
      %v543 = vsel %vm479, %v178, 0.0
      %v544 = vsel %vm480, %v177, 0.0
      %v545 = vsel %vm481, %v178, 0.0
      %v546 = vsel %vm482, %v177, 0.0
      %v547 = vsel %vm483, %v178, 0.0
      %v548 = vadd.f32 %v356, %v484
      %v549 = vadd.f32 %v357, %v485
      %v550 = vadd.f32 %v358, %v486
      %v551 = vadd.f32 %v359, %v487
      %v552 = vadd.f32 %v360, %v488
      %v553 = vadd.f32 %v361, %v489
      %v554 = vadd.f32 %v362, %v490
      %v555 = vadd.f32 %v363, %v491
      %v556 = vadd.f32 %v364, %v492
      %v557 = vadd.f32 %v365, %v493
      %v558 = vadd.f32 %v366, %v494
      %v559 = vadd.f32 %v367, %v495
      %v560 = vadd.f32 %v368, %v496
      %v561 = vadd.f32 %v369, %v497
      %v562 = vadd.f32 %v370, %v498
      %v563 = vadd.f32 %v371, %v499
      %v564 = vadd.f32 %v372, %v500
      %v565 = vadd.f32 %v373, %v501
      %v566 = vadd.f32 %v374, %v502
      %v567 = vadd.f32 %v375, %v503
      %v568 = vadd.f32 %v376, %v504
      %v569 = vadd.f32 %v377, %v505
      %v570 = vadd.f32 %v378, %v506
      %v571 = vadd.f32 %v379, %v507
      %v572 = vadd.f32 %v380, %v508
      %v573 = vadd.f32 %v381, %v509
      %v574 = vadd.f32 %v382, %v510
      %v575 = vadd.f32 %v383, %v511
      %v576 = vadd.f32 %v384, %v512
      %v577 = vadd.f32 %v385, %v513
      %v578 = vadd.f32 %v386, %v514
      %v579 = vadd.f32 %v387, %v515
      %v580 = vadd.f32 %v388, %v516
      %v581 = vadd.f32 %v389, %v517
      %v582 = vadd.f32 %v390, %v518
      %v583 = vadd.f32 %v391, %v519
      %v584 = vadd.f32 %v392, %v520
      %v585 = vadd.f32 %v393, %v521
      %v586 = vadd.f32 %v394, %v522
      %v587 = vadd.f32 %v395, %v523
      %v588 = vadd.f32 %v396, %v524
      %v589 = vadd.f32 %v397, %v525
      %v590 = vadd.f32 %v398, %v526
      %v591 = vadd.f32 %v399, %v527
      %v592 = vadd.f32 %v400, %v528
      %v593 = vadd.f32 %v401, %v529
      %v594 = vadd.f32 %v402, %v530
      %v595 = vadd.f32 %v403, %v531
      %v596 = vadd.f32 %v404, %v532
      %v597 = vadd.f32 %v405, %v533
      %v598 = vadd.f32 %v406, %v534
      %v599 = vadd.f32 %v407, %v535
      %v600 = vadd.f32 %v408, %v536
      %v601 = vadd.f32 %v409, %v537
      %v602 = vadd.f32 %v410, %v538
      %v603 = vadd.f32 %v411, %v539
      %v604 = vadd.f32 %v412, %v540
      %v605 = vadd.f32 %v413, %v541
      %v606 = vadd.f32 %v414, %v542
      %v607 = vadd.f32 %v415, %v543
      %v608 = vadd.f32 %v416, %v544
      %v609 = vadd.f32 %v417, %v545
      %v610 = vadd.f32 %v418, %v546
      %v611 = vadd.f32 %v419, %v547
      %vm612 = vcmp.eq.s32.totalorder %v228, 16
      %vm613 = vcmp.eq.s32.totalorder %v229, 16
      %vm614 = vcmp.eq.s32.totalorder %v230, 16
      %vm615 = vcmp.eq.s32.totalorder %v231, 16
      %vm616 = vcmp.eq.s32.totalorder %v232, 16
      %vm617 = vcmp.eq.s32.totalorder %v233, 16
      %vm618 = vcmp.eq.s32.totalorder %v234, 16
      %vm619 = vcmp.eq.s32.totalorder %v235, 16
      %vm620 = vcmp.eq.s32.totalorder %v236, 16
      %vm621 = vcmp.eq.s32.totalorder %v237, 16
      %vm622 = vcmp.eq.s32.totalorder %v238, 16
      %vm623 = vcmp.eq.s32.totalorder %v239, 16
      %vm624 = vcmp.eq.s32.totalorder %v240, 16
      %vm625 = vcmp.eq.s32.totalorder %v241, 16
      %vm626 = vcmp.eq.s32.totalorder %v242, 16
      %vm627 = vcmp.eq.s32.totalorder %v243, 16
      %vm628 = vcmp.eq.s32.totalorder %v244, 16
      %vm629 = vcmp.eq.s32.totalorder %v245, 16
      %vm630 = vcmp.eq.s32.totalorder %v246, 16
      %vm631 = vcmp.eq.s32.totalorder %v247, 16
      %vm632 = vcmp.eq.s32.totalorder %v248, 16
      %vm633 = vcmp.eq.s32.totalorder %v249, 16
      %vm634 = vcmp.eq.s32.totalorder %v250, 16
      %vm635 = vcmp.eq.s32.totalorder %v251, 16
      %vm636 = vcmp.eq.s32.totalorder %v252, 16
      %vm637 = vcmp.eq.s32.totalorder %v253, 16
      %vm638 = vcmp.eq.s32.totalorder %v254, 16
      %vm639 = vcmp.eq.s32.totalorder %v255, 16
      %vm640 = vcmp.eq.s32.totalorder %v256, 16
      %vm641 = vcmp.eq.s32.totalorder %v257, 16
      %vm642 = vcmp.eq.s32.totalorder %v258, 16
      %vm643 = vcmp.eq.s32.totalorder %v259, 16
      %vm644 = vcmp.eq.s32.totalorder %v260, 16
      %vm645 = vcmp.eq.s32.totalorder %v261, 16
      %vm646 = vcmp.eq.s32.totalorder %v262, 16
      %vm647 = vcmp.eq.s32.totalorder %v263, 16
      %vm648 = vcmp.eq.s32.totalorder %v264, 16
      %vm649 = vcmp.eq.s32.totalorder %v265, 16
      %vm650 = vcmp.eq.s32.totalorder %v266, 16
      %vm651 = vcmp.eq.s32.totalorder %v267, 16
      %vm652 = vcmp.eq.s32.totalorder %v268, 16
      %vm653 = vcmp.eq.s32.totalorder %v269, 16
      %vm654 = vcmp.eq.s32.totalorder %v270, 16
      %vm655 = vcmp.eq.s32.totalorder %v271, 16
      %vm656 = vcmp.eq.s32.totalorder %v272, 16
      %vm657 = vcmp.eq.s32.totalorder %v273, 16
      %vm658 = vcmp.eq.s32.totalorder %v274, 16
      %vm659 = vcmp.eq.s32.totalorder %v275, 16
      %vm660 = vcmp.eq.s32.totalorder %v276, 16
      %vm661 = vcmp.eq.s32.totalorder %v277, 16
      %vm662 = vcmp.eq.s32.totalorder %v278, 16
      %vm663 = vcmp.eq.s32.totalorder %v279, 16
      %vm664 = vcmp.eq.s32.totalorder %v280, 16
      %vm665 = vcmp.eq.s32.totalorder %v281, 16
      %vm666 = vcmp.eq.s32.totalorder %v282, 16
      %vm667 = vcmp.eq.s32.totalorder %v283, 16
      %vm668 = vcmp.eq.s32.totalorder %v284, 16
      %vm669 = vcmp.eq.s32.totalorder %v285, 16
      %vm670 = vcmp.eq.s32.totalorder %v286, 16
      %vm671 = vcmp.eq.s32.totalorder %v287, 16
      %vm672 = vcmp.eq.s32.totalorder %v288, 16
      %vm673 = vcmp.eq.s32.totalorder %v289, 16
      %vm674 = vcmp.eq.s32.totalorder %v290, 16
      %vm675 = vcmp.eq.s32.totalorder %v291, 16
      %v676 = vsel %vm612, %v183, 0.0
      %v677 = vsel %vm613, %v184, 0.0
      %v678 = vsel %vm614, %v183, 0.0
      %v679 = vsel %vm615, %v184, 0.0
      %v680 = vsel %vm616, %v183, 0.0
      %v681 = vsel %vm617, %v184, 0.0
      %v682 = vsel %vm618, %v183, 0.0
      %v683 = vsel %vm619, %v184, 0.0
      %v684 = vsel %vm620, %v183, 0.0
      %v685 = vsel %vm621, %v184, 0.0
      %v686 = vsel %vm622, %v183, 0.0
      %v687 = vsel %vm623, %v184, 0.0
      %v688 = vsel %vm624, %v183, 0.0
      %v689 = vsel %vm625, %v184, 0.0
      %v690 = vsel %vm626, %v183, 0.0
      %v691 = vsel %vm627, %v184, 0.0
      %v692 = vsel %vm628, %v183, 0.0
      %v693 = vsel %vm629, %v184, 0.0
      %v694 = vsel %vm630, %v183, 0.0
      %v695 = vsel %vm631, %v184, 0.0
      %v696 = vsel %vm632, %v183, 0.0
      %v697 = vsel %vm633, %v184, 0.0
      %v698 = vsel %vm634, %v183, 0.0
      %v699 = vsel %vm635, %v184, 0.0
      %v700 = vsel %vm636, %v183, 0.0
      %v701 = vsel %vm637, %v184, 0.0
      %v702 = vsel %vm638, %v183, 0.0
      %v703 = vsel %vm639, %v184, 0.0
      %v704 = vsel %vm640, %v183, 0.0
      %v705 = vsel %vm641, %v184, 0.0
      %v706 = vsel %vm642, %v183, 0.0
      %v707 = vsel %vm643, %v184, 0.0
      %v708 = vsel %vm644, %v183, 0.0
      %v709 = vsel %vm645, %v184, 0.0
      %v710 = vsel %vm646, %v183, 0.0
      %v711 = vsel %vm647, %v184, 0.0
      %v712 = vsel %vm648, %v183, 0.0
      %v713 = vsel %vm649, %v184, 0.0
      %v714 = vsel %vm650, %v183, 0.0
      %v715 = vsel %vm651, %v184, 0.0
      %v716 = vsel %vm652, %v183, 0.0
      %v717 = vsel %vm653, %v184, 0.0
      %v718 = vsel %vm654, %v183, 0.0
      %v719 = vsel %vm655, %v184, 0.0
      %v720 = vsel %vm656, %v183, 0.0
      %v721 = vsel %vm657, %v184, 0.0
      %v722 = vsel %vm658, %v183, 0.0
      %v723 = vsel %vm659, %v184, 0.0
      %v724 = vsel %vm660, %v183, 0.0
      %v725 = vsel %vm661, %v184, 0.0
      %v726 = vsel %vm662, %v183, 0.0
      %v727 = vsel %vm663, %v184, 0.0
      %v728 = vsel %vm664, %v183, 0.0
      %v729 = vsel %vm665, %v184, 0.0
      %v730 = vsel %vm666, %v183, 0.0
      %v731 = vsel %vm667, %v184, 0.0
      %v732 = vsel %vm668, %v183, 0.0
      %v733 = vsel %vm669, %v184, 0.0
      %v734 = vsel %vm670, %v183, 0.0
      %v735 = vsel %vm671, %v184, 0.0
      %v736 = vsel %vm672, %v183, 0.0
      %v737 = vsel %vm673, %v184, 0.0
      %v738 = vsel %vm674, %v183, 0.0
      %v739 = vsel %vm675, %v184, 0.0
      %v740 = vadd.f32 %v548, %v676
      %v741 = vadd.f32 %v549, %v677
      %v742 = vadd.f32 %v550, %v678
      %v743 = vadd.f32 %v551, %v679
      %v744 = vadd.f32 %v552, %v680
      %v745 = vadd.f32 %v553, %v681
      %v746 = vadd.f32 %v554, %v682
      %v747 = vadd.f32 %v555, %v683
      %v748 = vadd.f32 %v556, %v684
      %v749 = vadd.f32 %v557, %v685
      %v750 = vadd.f32 %v558, %v686
      %v751 = vadd.f32 %v559, %v687
      %v752 = vadd.f32 %v560, %v688
      %v753 = vadd.f32 %v561, %v689
      %v754 = vadd.f32 %v562, %v690
      %v755 = vadd.f32 %v563, %v691
      %v756 = vadd.f32 %v564, %v692
      %v757 = vadd.f32 %v565, %v693
      %v758 = vadd.f32 %v566, %v694
      %v759 = vadd.f32 %v567, %v695
      %v760 = vadd.f32 %v568, %v696
      %v761 = vadd.f32 %v569, %v697
      %v762 = vadd.f32 %v570, %v698
      %v763 = vadd.f32 %v571, %v699
      %v764 = vadd.f32 %v572, %v700
      %v765 = vadd.f32 %v573, %v701
      %v766 = vadd.f32 %v574, %v702
      %v767 = vadd.f32 %v575, %v703
      %v768 = vadd.f32 %v576, %v704
      %v769 = vadd.f32 %v577, %v705
      %v770 = vadd.f32 %v578, %v706
      %v771 = vadd.f32 %v579, %v707
      %v772 = vadd.f32 %v580, %v708
      %v773 = vadd.f32 %v581, %v709
      %v774 = vadd.f32 %v582, %v710
      %v775 = vadd.f32 %v583, %v711
      %v776 = vadd.f32 %v584, %v712
      %v777 = vadd.f32 %v585, %v713
      %v778 = vadd.f32 %v586, %v714
      %v779 = vadd.f32 %v587, %v715
      %v780 = vadd.f32 %v588, %v716
      %v781 = vadd.f32 %v589, %v717
      %v782 = vadd.f32 %v590, %v718
      %v783 = vadd.f32 %v591, %v719
      %v784 = vadd.f32 %v592, %v720
      %v785 = vadd.f32 %v593, %v721
      %v786 = vadd.f32 %v594, %v722
      %v787 = vadd.f32 %v595, %v723
      %v788 = vadd.f32 %v596, %v724
      %v789 = vadd.f32 %v597, %v725
      %v790 = vadd.f32 %v598, %v726
      %v791 = vadd.f32 %v599, %v727
      %v792 = vadd.f32 %v600, %v728
      %v793 = vadd.f32 %v601, %v729
      %v794 = vadd.f32 %v602, %v730
      %v795 = vadd.f32 %v603, %v731
      %v796 = vadd.f32 %v604, %v732
      %v797 = vadd.f32 %v605, %v733
      %v798 = vadd.f32 %v606, %v734
      %v799 = vadd.f32 %v607, %v735
      %v800 = vadd.f32 %v608, %v736
      %v801 = vadd.f32 %v609, %v737
      %v802 = vadd.f32 %v610, %v738
      %v803 = vadd.f32 %v611, %v739
      %vm804 = vcmp.eq.s32.totalorder %v228, 17
      %vm805 = vcmp.eq.s32.totalorder %v229, 17
      %vm806 = vcmp.eq.s32.totalorder %v230, 17
      %vm807 = vcmp.eq.s32.totalorder %v231, 17
      %vm808 = vcmp.eq.s32.totalorder %v232, 17
      %vm809 = vcmp.eq.s32.totalorder %v233, 17
      %vm810 = vcmp.eq.s32.totalorder %v234, 17
      %vm811 = vcmp.eq.s32.totalorder %v235, 17
      %vm812 = vcmp.eq.s32.totalorder %v236, 17
      %vm813 = vcmp.eq.s32.totalorder %v237, 17
      %vm814 = vcmp.eq.s32.totalorder %v238, 17
      %vm815 = vcmp.eq.s32.totalorder %v239, 17
      %vm816 = vcmp.eq.s32.totalorder %v240, 17
      %vm817 = vcmp.eq.s32.totalorder %v241, 17
      %vm818 = vcmp.eq.s32.totalorder %v242, 17
      %vm819 = vcmp.eq.s32.totalorder %v243, 17
      %vm820 = vcmp.eq.s32.totalorder %v244, 17
      %vm821 = vcmp.eq.s32.totalorder %v245, 17
      %vm822 = vcmp.eq.s32.totalorder %v246, 17
      %vm823 = vcmp.eq.s32.totalorder %v247, 17
      %vm824 = vcmp.eq.s32.totalorder %v248, 17
      %vm825 = vcmp.eq.s32.totalorder %v249, 17
      %vm826 = vcmp.eq.s32.totalorder %v250, 17
      %vm827 = vcmp.eq.s32.totalorder %v251, 17
      %vm828 = vcmp.eq.s32.totalorder %v252, 17
      %vm829 = vcmp.eq.s32.totalorder %v253, 17
      %vm830 = vcmp.eq.s32.totalorder %v254, 17
      %vm831 = vcmp.eq.s32.totalorder %v255, 17
      %vm832 = vcmp.eq.s32.totalorder %v256, 17
      %vm833 = vcmp.eq.s32.totalorder %v257, 17
      %vm834 = vcmp.eq.s32.totalorder %v258, 17
      %vm835 = vcmp.eq.s32.totalorder %v259, 17
      %vm836 = vcmp.eq.s32.totalorder %v260, 17
      %vm837 = vcmp.eq.s32.totalorder %v261, 17
      %vm838 = vcmp.eq.s32.totalorder %v262, 17
      %vm839 = vcmp.eq.s32.totalorder %v263, 17
      %vm840 = vcmp.eq.s32.totalorder %v264, 17
      %vm841 = vcmp.eq.s32.totalorder %v265, 17
      %vm842 = vcmp.eq.s32.totalorder %v266, 17
      %vm843 = vcmp.eq.s32.totalorder %v267, 17
      %vm844 = vcmp.eq.s32.totalorder %v268, 17
      %vm845 = vcmp.eq.s32.totalorder %v269, 17
      %vm846 = vcmp.eq.s32.totalorder %v270, 17
      %vm847 = vcmp.eq.s32.totalorder %v271, 17
      %vm848 = vcmp.eq.s32.totalorder %v272, 17
      %vm849 = vcmp.eq.s32.totalorder %v273, 17
      %vm850 = vcmp.eq.s32.totalorder %v274, 17
      %vm851 = vcmp.eq.s32.totalorder %v275, 17
      %vm852 = vcmp.eq.s32.totalorder %v276, 17
      %vm853 = vcmp.eq.s32.totalorder %v277, 17
      %vm854 = vcmp.eq.s32.totalorder %v278, 17
      %vm855 = vcmp.eq.s32.totalorder %v279, 17
      %vm856 = vcmp.eq.s32.totalorder %v280, 17
      %vm857 = vcmp.eq.s32.totalorder %v281, 17
      %vm858 = vcmp.eq.s32.totalorder %v282, 17
      %vm859 = vcmp.eq.s32.totalorder %v283, 17
      %vm860 = vcmp.eq.s32.totalorder %v284, 17
      %vm861 = vcmp.eq.s32.totalorder %v285, 17
      %vm862 = vcmp.eq.s32.totalorder %v286, 17
      %vm863 = vcmp.eq.s32.totalorder %v287, 17
      %vm864 = vcmp.eq.s32.totalorder %v288, 17
      %vm865 = vcmp.eq.s32.totalorder %v289, 17
      %vm866 = vcmp.eq.s32.totalorder %v290, 17
      %vm867 = vcmp.eq.s32.totalorder %v291, 17
      %v868 = vsel %vm804, %v189, 0.0
      %v869 = vsel %vm805, %v190, 0.0
      %v870 = vsel %vm806, %v189, 0.0
      %v871 = vsel %vm807, %v190, 0.0
      %v872 = vsel %vm808, %v189, 0.0
      %v873 = vsel %vm809, %v190, 0.0
      %v874 = vsel %vm810, %v189, 0.0
      %v875 = vsel %vm811, %v190, 0.0
      %v876 = vsel %vm812, %v189, 0.0
      %v877 = vsel %vm813, %v190, 0.0
      %v878 = vsel %vm814, %v189, 0.0
      %v879 = vsel %vm815, %v190, 0.0
      %v880 = vsel %vm816, %v189, 0.0
      %v881 = vsel %vm817, %v190, 0.0
      %v882 = vsel %vm818, %v189, 0.0
      %v883 = vsel %vm819, %v190, 0.0
      %v884 = vsel %vm820, %v189, 0.0
      %v885 = vsel %vm821, %v190, 0.0
      %v886 = vsel %vm822, %v189, 0.0
      %v887 = vsel %vm823, %v190, 0.0
      %v888 = vsel %vm824, %v189, 0.0
      %v889 = vsel %vm825, %v190, 0.0
      %v890 = vsel %vm826, %v189, 0.0
      %v891 = vsel %vm827, %v190, 0.0
      %v892 = vsel %vm828, %v189, 0.0
      %v893 = vsel %vm829, %v190, 0.0
      %v894 = vsel %vm830, %v189, 0.0
      %v895 = vsel %vm831, %v190, 0.0
      %v896 = vsel %vm832, %v189, 0.0
      %v897 = vsel %vm833, %v190, 0.0
      %v898 = vsel %vm834, %v189, 0.0
      %v899 = vsel %vm835, %v190, 0.0
      %v900 = vsel %vm836, %v189, 0.0
      %v901 = vsel %vm837, %v190, 0.0
      %v902 = vsel %vm838, %v189, 0.0
      %v903 = vsel %vm839, %v190, 0.0
      %v904 = vsel %vm840, %v189, 0.0
      %v905 = vsel %vm841, %v190, 0.0
      %v906 = vsel %vm842, %v189, 0.0
      %v907 = vsel %vm843, %v190, 0.0
      %v908 = vsel %vm844, %v189, 0.0
      %v909 = vsel %vm845, %v190, 0.0
      %v910 = vsel %vm846, %v189, 0.0
      %v911 = vsel %vm847, %v190, 0.0
      %v912 = vsel %vm848, %v189, 0.0
      %v913 = vsel %vm849, %v190, 0.0
      %v914 = vsel %vm850, %v189, 0.0
      %v915 = vsel %vm851, %v190, 0.0
      %v916 = vsel %vm852, %v189, 0.0
      %v917 = vsel %vm853, %v190, 0.0
      %v918 = vsel %vm854, %v189, 0.0
      %v919 = vsel %vm855, %v190, 0.0
      %v920 = vsel %vm856, %v189, 0.0
      %v921 = vsel %vm857, %v190, 0.0
      %v922 = vsel %vm858, %v189, 0.0
      %v923 = vsel %vm859, %v190, 0.0
      %v924 = vsel %vm860, %v189, 0.0
      %v925 = vsel %vm861, %v190, 0.0
      %v926 = vsel %vm862, %v189, 0.0
      %v927 = vsel %vm863, %v190, 0.0
      %v928 = vsel %vm864, %v189, 0.0
      %v929 = vsel %vm865, %v190, 0.0
      %v930 = vsel %vm866, %v189, 0.0
      %v931 = vsel %vm867, %v190, 0.0
      %v932 = vadd.f32 %v740, %v868
      %v933 = vadd.f32 %v741, %v869
      %v934 = vadd.f32 %v742, %v870
      %v935 = vadd.f32 %v743, %v871
      %v936 = vadd.f32 %v744, %v872
      %v937 = vadd.f32 %v745, %v873
      %v938 = vadd.f32 %v746, %v874
      %v939 = vadd.f32 %v747, %v875
      %v940 = vadd.f32 %v748, %v876
      %v941 = vadd.f32 %v749, %v877
      %v942 = vadd.f32 %v750, %v878
      %v943 = vadd.f32 %v751, %v879
      %v944 = vadd.f32 %v752, %v880
      %v945 = vadd.f32 %v753, %v881
      %v946 = vadd.f32 %v754, %v882
      %v947 = vadd.f32 %v755, %v883
      %v948 = vadd.f32 %v756, %v884
      %v949 = vadd.f32 %v757, %v885
      %v950 = vadd.f32 %v758, %v886
      %v951 = vadd.f32 %v759, %v887
      %v952 = vadd.f32 %v760, %v888
      %v953 = vadd.f32 %v761, %v889
      %v954 = vadd.f32 %v762, %v890
      %v955 = vadd.f32 %v763, %v891
      %v956 = vadd.f32 %v764, %v892
      %v957 = vadd.f32 %v765, %v893
      %v958 = vadd.f32 %v766, %v894
      %v959 = vadd.f32 %v767, %v895
      %v960 = vadd.f32 %v768, %v896
      %v961 = vadd.f32 %v769, %v897
      %v962 = vadd.f32 %v770, %v898
      %v963 = vadd.f32 %v771, %v899
      %v964 = vadd.f32 %v772, %v900
      %v965 = vadd.f32 %v773, %v901
      %v966 = vadd.f32 %v774, %v902
      %v967 = vadd.f32 %v775, %v903
      %v968 = vadd.f32 %v776, %v904
      %v969 = vadd.f32 %v777, %v905
      %v970 = vadd.f32 %v778, %v906
      %v971 = vadd.f32 %v779, %v907
      %v972 = vadd.f32 %v780, %v908
      %v973 = vadd.f32 %v781, %v909
      %v974 = vadd.f32 %v782, %v910
      %v975 = vadd.f32 %v783, %v911
      %v976 = vadd.f32 %v784, %v912
      %v977 = vadd.f32 %v785, %v913
      %v978 = vadd.f32 %v786, %v914
      %v979 = vadd.f32 %v787, %v915
      %v980 = vadd.f32 %v788, %v916
      %v981 = vadd.f32 %v789, %v917
      %v982 = vadd.f32 %v790, %v918
      %v983 = vadd.f32 %v791, %v919
      %v984 = vadd.f32 %v792, %v920
      %v985 = vadd.f32 %v793, %v921
      %v986 = vadd.f32 %v794, %v922
      %v987 = vadd.f32 %v795, %v923
      %v988 = vadd.f32 %v796, %v924
      %v989 = vadd.f32 %v797, %v925
      %v990 = vadd.f32 %v798, %v926
      %v991 = vadd.f32 %v799, %v927
      %v992 = vadd.f32 %v800, %v928
      %v993 = vadd.f32 %v801, %v929
      %v994 = vadd.f32 %v802, %v930
      %v995 = vadd.f32 %v803, %v931
      %v996 = vpack.c.bf16 %v934, %v932
      %v997 = vpack.c.bf16 %v935, %v933
      %v998 = vpack.c.bf16 %v938, %v936
      %v999 = vpack.c.bf16 %v939, %v937
      %v1000 = vpack.c.bf16 %v942, %v940
      %v1001 = vpack.c.bf16 %v943, %v941
      %v1002 = vpack.c.bf16 %v946, %v944
      %v1003 = vpack.c.bf16 %v947, %v945
      %v1004 = vpack.c.bf16 %v950, %v948
      %v1005 = vpack.c.bf16 %v951, %v949
      %v1006 = vpack.c.bf16 %v954, %v952
      %v1007 = vpack.c.bf16 %v955, %v953
      %v1008 = vpack.c.bf16 %v958, %v956
      %v1009 = vpack.c.bf16 %v959, %v957
      %v1010 = vpack.c.bf16 %v962, %v960
      %v1011 = vpack.c.bf16 %v963, %v961
      %v1012 = vpack.c.bf16 %v966, %v964
      %v1013 = vpack.c.bf16 %v967, %v965
      %v1014 = vpack.c.bf16 %v970, %v968
      %v1015 = vpack.c.bf16 %v971, %v969
      %v1016 = vpack.c.bf16 %v974, %v972
      %v1017 = vpack.c.bf16 %v975, %v973
      %v1018 = vpack.c.bf16 %v978, %v976
      %v1019 = vpack.c.bf16 %v979, %v977
      %v1020 = vpack.c.bf16 %v982, %v980
      %v1021 = vpack.c.bf16 %v983, %v981
      %v1022 = vpack.c.bf16 %v986, %v984
      %v1023 = vpack.c.bf16 %v987, %v985
      %v1024 = vpack.c.bf16 %v990, %v988
      %v1025 = vpack.c.bf16 %v991, %v989
      %v1026 = vpack.c.bf16 %v994, %v992
      %v1027 = vpack.c.bf16 %v995, %v993
      %v1060 = vunpack.c.l.b16 %v996
      %v1061 = vunpack.c.l.b16 %v997
      %v1062 = vunpack.c.h.b16 %v996
      %v1063 = vunpack.c.h.b16 %v997
      %v1064 = vunpack.c.l.b16 %v998
      %v1065 = vunpack.c.l.b16 %v999
      %v1066 = vunpack.c.h.b16 %v998
      %v1067 = vunpack.c.h.b16 %v999
      %v1068 = vunpack.c.l.b16 %v1000
      %v1069 = vunpack.c.l.b16 %v1001
      %v1070 = vunpack.c.h.b16 %v1000
      %v1071 = vunpack.c.h.b16 %v1001
      %v1072 = vunpack.c.l.b16 %v1002
      %v1073 = vunpack.c.l.b16 %v1003
      %v1074 = vunpack.c.h.b16 %v1002
      %v1075 = vunpack.c.h.b16 %v1003
      %v1076 = vunpack.c.l.b16 %v1004
      %v1077 = vunpack.c.l.b16 %v1005
      %v1078 = vunpack.c.h.b16 %v1004
      %v1079 = vunpack.c.h.b16 %v1005
      %v1080 = vunpack.c.l.b16 %v1006
      %v1081 = vunpack.c.l.b16 %v1007
      %v1082 = vunpack.c.h.b16 %v1006
      %v1083 = vunpack.c.h.b16 %v1007
      %v1084 = vunpack.c.l.b16 %v1008
      %v1085 = vunpack.c.l.b16 %v1009
      %v1086 = vunpack.c.h.b16 %v1008
      %v1087 = vunpack.c.h.b16 %v1009
      %v1088 = vunpack.c.l.b16 %v1010
      %v1089 = vunpack.c.l.b16 %v1011
      %v1090 = vunpack.c.h.b16 %v1010
      %v1091 = vunpack.c.h.b16 %v1011
      %v1092 = vunpack.c.l.b16 %v1012
      %v1093 = vunpack.c.l.b16 %v1013
      %v1094 = vunpack.c.h.b16 %v1012
      %v1095 = vunpack.c.h.b16 %v1013
      %v1096 = vunpack.c.l.b16 %v1014
      %v1097 = vunpack.c.l.b16 %v1015
      %v1098 = vunpack.c.h.b16 %v1014
      %v1099 = vunpack.c.h.b16 %v1015
      %v1100 = vunpack.c.l.b16 %v1016
      %v1101 = vunpack.c.l.b16 %v1017
      %v1102 = vunpack.c.h.b16 %v1016
      %v1103 = vunpack.c.h.b16 %v1017
      %v1104 = vunpack.c.l.b16 %v1018
      %v1105 = vunpack.c.l.b16 %v1019
      %v1106 = vunpack.c.h.b16 %v1018
      %v1107 = vunpack.c.h.b16 %v1019
      %v1108 = vunpack.c.l.b16 %v1020
      %v1109 = vunpack.c.l.b16 %v1021
      %v1110 = vunpack.c.h.b16 %v1020
      %v1111 = vunpack.c.h.b16 %v1021
      %v1112 = vunpack.c.l.b16 %v1022
      %v1113 = vunpack.c.l.b16 %v1023
      %v1114 = vunpack.c.h.b16 %v1022
      %v1115 = vunpack.c.h.b16 %v1023
      %v1116 = vunpack.c.l.b16 %v1024
      %v1117 = vunpack.c.l.b16 %v1025
      %v1118 = vunpack.c.h.b16 %v1024
      %v1119 = vunpack.c.h.b16 %v1025
      %v1120 = vunpack.c.l.b16 %v1026
      %v1121 = vunpack.c.l.b16 %v1027
      %v1122 = vunpack.c.h.b16 %v1026
      %v1123 = vunpack.c.h.b16 %v1027
      %v1124 = vpack.c.b16 %v1061, %v1060
      %v1125 = vpack.c.b16 %v1063, %v1062
      %v1126 = vpack.c.b16 %v1065, %v1064
      %v1127 = vpack.c.b16 %v1067, %v1066
      %v1128 = vpack.c.b16 %v1069, %v1068
      %v1129 = vpack.c.b16 %v1071, %v1070
      %v1130 = vpack.c.b16 %v1073, %v1072
      %v1131 = vpack.c.b16 %v1075, %v1074
      %v1132 = vpack.c.b16 %v1077, %v1076
      %v1133 = vpack.c.b16 %v1079, %v1078
      %v1134 = vpack.c.b16 %v1081, %v1080
      %v1135 = vpack.c.b16 %v1083, %v1082
      %v1136 = vpack.c.b16 %v1085, %v1084
      %v1137 = vpack.c.b16 %v1087, %v1086
      %v1138 = vpack.c.b16 %v1089, %v1088
      %v1139 = vpack.c.b16 %v1091, %v1090
      %v1140 = vpack.c.b16 %v1093, %v1092
      %v1141 = vpack.c.b16 %v1095, %v1094
      %v1142 = vpack.c.b16 %v1097, %v1096
      %v1143 = vpack.c.b16 %v1099, %v1098
      %v1144 = vpack.c.b16 %v1101, %v1100
      %v1145 = vpack.c.b16 %v1103, %v1102
      %v1146 = vpack.c.b16 %v1105, %v1104
      %v1147 = vpack.c.b16 %v1107, %v1106
      %v1148 = vpack.c.b16 %v1109, %v1108
      %v1149 = vpack.c.b16 %v1111, %v1110
      %v1150 = vpack.c.b16 %v1113, %v1112
      %v1151 = vpack.c.b16 %v1115, %v1114
      %v1152 = vpack.c.b16 %v1117, %v1116
      %v1153 = vpack.c.b16 %v1119, %v1118
      %v1154 = vpack.c.b16 %v1121, %v1120
      %v1155 = vpack.c.b16 %v1123, %v1122
      %1188 = vst [vmem:[#allocation2] sm:$0xff] %v1124
      %1189 = vst [vmem:[#allocation2 + $0x8] sm:$0xff] %v1125
      %1190 = vst [vmem:[#allocation2 + $0x10] sm:$0xff] %v1126
      %1191 = vst [vmem:[#allocation2 + $0x18] sm:$0xff] %v1127
      %1192 = vst [vmem:[#allocation2 + $0x20] sm:$0xff] %v1128
      %1193 = vst [vmem:[#allocation2 + $0x28] sm:$0xff] %v1129
      %1194 = vst [vmem:[#allocation2 + $0x30] sm:$0xff] %v1130
      %1195 = vst [vmem:[#allocation2 + $0x38] sm:$0xff] %v1131
      %1196 = vst [vmem:[#allocation2 + $0x40] sm:$0xff] %v1132
      %1197 = vst [vmem:[#allocation2 + $0x48] sm:$0xff] %v1133
      %1198 = vst [vmem:[#allocation2 + $0x50] sm:$0xff] %v1134
      %1199 = vst [vmem:[#allocation2 + $0x58] sm:$0xff] %v1135
      %1200 = vst [vmem:[#allocation2 + $0x60] sm:$0xff] %v1136
      %1201 = vst [vmem:[#allocation2 + $0x68] sm:$0xff] %v1137
      %1202 = vst [vmem:[#allocation2 + $0x70] sm:$0xff] %v1138
      %1203 = vst [vmem:[#allocation2 + $0x78] sm:$0xff] %v1139
      %1204 = vst [vmem:[#allocation2 + $0x80] sm:$0xff] %v1140
      %1205 = vst [vmem:[#allocation2 + $0x88] sm:$0xff] %v1141
      %1206 = vst [vmem:[#allocation2 + $0x90] sm:$0xff] %v1142
      %1207 = vst [vmem:[#allocation2 + $0x98] sm:$0xff] %v1143
      %1208 = vst [vmem:[#allocation2 + $0xa0] sm:$0xff] %v1144
      %1209 = vst [vmem:[#allocation2 + $0xa8] sm:$0xff] %v1145
      %1210 = vst [vmem:[#allocation2 + $0xb0] sm:$0xff] %v1146
      %1211 = vst [vmem:[#allocation2 + $0xb8] sm:$0xff] %v1147
      %1212 = vst [vmem:[#allocation2 + $0xc0] sm:$0xff] %v1148
      %1213 = vst [vmem:[#allocation2 + $0xc8] sm:$0xff] %v1149
      %1214 = vst [vmem:[#allocation2 + $0xd0] sm:$0xff] %v1150
      %1215 = vst [vmem:[#allocation2 + $0xd8] sm:$0xff] %v1151
      %1216 = vst [vmem:[#allocation2 + $0xe0] sm:$0xff] %v1152
      %1217 = vst [vmem:[#allocation2 + $0xe8] sm:$0xff] %v1153
      %1218 = vst [vmem:[#allocation2 + $0xf0] sm:$0xff] %v1154
      %1219 = vst [vmem:[#allocation2 + $0xf8] sm:$0xff] %v1155
    $region21: #{tpu_custom_call.1} parent=1 // pred_fallthru
      _
    %v1220 = vld [vmem:[#allocation7] sm:$0xff]
    %v1221 = vld [vmem:[#allocation2] sm:$0xff]
    %v1222 = vld [vmem:[#allocation2 + $0x8] sm:$0xff]
    %v1223 = vld [vmem:[#allocation2 + $0x10] sm:$0xff]
    %v1224 = vld [vmem:[#allocation2 + $0x18] sm:$0xff]
    %v1225 = vld [vmem:[#allocation2 + $0x20] sm:$0xff]
    %v1226 = vld [vmem:[#allocation2 + $0x28] sm:$0xff]
    %v1227 = vld [vmem:[#allocation2 + $0x30] sm:$0xff]
    %v1228 = vld [vmem:[#allocation2 + $0x38] sm:$0xff]
    %v1229 = vld [vmem:[#allocation2 + $0x40] sm:$0xff]
    %v1230 = vld [vmem:[#allocation2 + $0x48] sm:$0xff]
    %v1231 = vld [vmem:[#allocation2 + $0x50] sm:$0xff]
    %v1232 = vld [vmem:[#allocation2 + $0x58] sm:$0xff]
    %v1233 = vld [vmem:[#allocation2 + $0x60] sm:$0xff]
    %v1234 = vld [vmem:[#allocation2 + $0x68] sm:$0xff]
    %v1235 = vld [vmem:[#allocation2 + $0x70] sm:$0xff]
    %v1236 = vld [vmem:[#allocation2 + $0x78] sm:$0xff]
    %v1237 = vld [vmem:[#allocation2 + $0x80] sm:$0xff]
    %v1238 = vld [vmem:[#allocation2 + $0x88] sm:$0xff]
    %v1239 = vld [vmem:[#allocation2 + $0x90] sm:$0xff]
    %v1240 = vld [vmem:[#allocation2 + $0x98] sm:$0xff]
    %v1241 = vld [vmem:[#allocation2 + $0xa0] sm:$0xff]
    %v1242 = vld [vmem:[#allocation2 + $0xa8] sm:$0xff]
    %v1243 = vld [vmem:[#allocation2 + $0xb0] sm:$0xff]
    %v1244 = vld [vmem:[#allocation2 + $0xb8] sm:$0xff]
    %v1245 = vld [vmem:[#allocation2 + $0xc0] sm:$0xff]
    %v1246 = vld [vmem:[#allocation2 + $0xc8] sm:$0xff]
    %v1247 = vld [vmem:[#allocation2 + $0xd0] sm:$0xff]
    %v1248 = vld [vmem:[#allocation2 + $0xd8] sm:$0xff]
    %v1249 = vld [vmem:[#allocation2 + $0xe0] sm:$0xff]
    %v1250 = vld [vmem:[#allocation2 + $0xe8] sm:$0xff]
    %v1251 = vld [vmem:[#allocation2 + $0xf0] sm:$0xff]
    %v1252 = vld [vmem:[#allocation2 + $0xf8] sm:$0xff]
    %v1254 = vunpack.c.l.b16 %v1220
    %v1255 = vunpack.c.h.b16 %v1220
    %v1256 = vpack.c.b16 %v1254, %v1254
    %v1257 = vpack.c.b16 %v1255, %v1255
    %v1292 = vunpack.c.l.b16 %v1221
    %v1293 = vunpack.c.h.b16 %v1221
    %v1294 = vunpack.c.l.b16 %v1222
    %v1295 = vunpack.c.h.b16 %v1222
    %v1296 = vunpack.c.l.b16 %v1223
    %v1297 = vunpack.c.h.b16 %v1223
    %v1298 = vunpack.c.l.b16 %v1224
    %v1299 = vunpack.c.h.b16 %v1224
    %v1300 = vunpack.c.l.b16 %v1225
    %v1301 = vunpack.c.h.b16 %v1225
    %v1302 = vunpack.c.l.b16 %v1226
    %v1303 = vunpack.c.h.b16 %v1226
    %v1304 = vunpack.c.l.b16 %v1227
    %v1305 = vunpack.c.h.b16 %v1227
    %v1306 = vunpack.c.l.b16 %v1228
    %v1307 = vunpack.c.h.b16 %v1228
    %v1308 = vunpack.c.l.b16 %v1229
    %v1309 = vunpack.c.h.b16 %v1229
    %v1310 = vunpack.c.l.b16 %v1230
    %v1311 = vunpack.c.h.b16 %v1230
    %v1312 = vunpack.c.l.b16 %v1231
    %v1313 = vunpack.c.h.b16 %v1231
    %v1314 = vunpack.c.l.b16 %v1232
    %v1315 = vunpack.c.h.b16 %v1232
    %v1316 = vunpack.c.l.b16 %v1233
    %v1317 = vunpack.c.h.b16 %v1233
    %v1318 = vunpack.c.l.b16 %v1234
    %v1319 = vunpack.c.h.b16 %v1234
    %v1320 = vunpack.c.l.b16 %v1235
    %v1321 = vunpack.c.h.b16 %v1235
    %v1322 = vunpack.c.l.b16 %v1236
    %v1323 = vunpack.c.h.b16 %v1236
    %v1324 = vunpack.c.l.b16 %v1237
    %v1325 = vunpack.c.h.b16 %v1237
    %v1326 = vunpack.c.l.b16 %v1238
    %v1327 = vunpack.c.h.b16 %v1238
    %v1328 = vunpack.c.l.b16 %v1239
    %v1329 = vunpack.c.h.b16 %v1239
    %v1330 = vunpack.c.l.b16 %v1240
    %v1331 = vunpack.c.h.b16 %v1240
    %v1332 = vunpack.c.l.b16 %v1241
    %v1333 = vunpack.c.h.b16 %v1241
    %v1334 = vunpack.c.l.b16 %v1242
    %v1335 = vunpack.c.h.b16 %v1242
    %v1336 = vunpack.c.l.b16 %v1243
    %v1337 = vunpack.c.h.b16 %v1243
    %v1338 = vunpack.c.l.b16 %v1244
    %v1339 = vunpack.c.h.b16 %v1244
    %v1340 = vunpack.c.l.b16 %v1245
    %v1341 = vunpack.c.h.b16 %v1245
    %v1342 = vunpack.c.l.b16 %v1246
    %v1343 = vunpack.c.h.b16 %v1246
    %v1344 = vunpack.c.l.b16 %v1247
    %v1345 = vunpack.c.h.b16 %v1247
    %v1346 = vunpack.c.l.b16 %v1248
    %v1347 = vunpack.c.h.b16 %v1248
    %v1348 = vunpack.c.l.b16 %v1249
    %v1349 = vunpack.c.h.b16 %v1249
    %v1350 = vunpack.c.l.b16 %v1250
    %v1351 = vunpack.c.h.b16 %v1250
    %v1352 = vunpack.c.l.b16 %v1251
    %v1353 = vunpack.c.h.b16 %v1251
    %v1354 = vunpack.c.l.b16 %v1252
    %v1355 = vunpack.c.h.b16 %v1252
    %v1356 = vpack.c.b16 %v1294, %v1292
    %v1357 = vpack.c.b16 %v1295, %v1293
    %v1358 = vpack.c.b16 %v1298, %v1296
    %v1359 = vpack.c.b16 %v1299, %v1297
    %v1360 = vpack.c.b16 %v1302, %v1300
    %v1361 = vpack.c.b16 %v1303, %v1301
    %v1362 = vpack.c.b16 %v1306, %v1304
    %v1363 = vpack.c.b16 %v1307, %v1305
    %v1364 = vpack.c.b16 %v1310, %v1308
    %v1365 = vpack.c.b16 %v1311, %v1309
    %v1366 = vpack.c.b16 %v1314, %v1312
    %v1367 = vpack.c.b16 %v1315, %v1313
    %v1368 = vpack.c.b16 %v1318, %v1316
    %v1369 = vpack.c.b16 %v1319, %v1317
    %v1370 = vpack.c.b16 %v1322, %v1320
    %v1371 = vpack.c.b16 %v1323, %v1321
    %v1372 = vpack.c.b16 %v1326, %v1324
    %v1373 = vpack.c.b16 %v1327, %v1325
    %v1374 = vpack.c.b16 %v1330, %v1328
    %v1375 = vpack.c.b16 %v1331, %v1329
    %v1376 = vpack.c.b16 %v1334, %v1332
    %v1377 = vpack.c.b16 %v1335, %v1333
    %v1378 = vpack.c.b16 %v1338, %v1336
    %v1379 = vpack.c.b16 %v1339, %v1337
    %v1380 = vpack.c.b16 %v1342, %v1340
    %v1381 = vpack.c.b16 %v1343, %v1341
    %v1382 = vpack.c.b16 %v1346, %v1344
    %v1383 = vpack.c.b16 %v1347, %v1345
    %v1384 = vpack.c.b16 %v1350, %v1348
    %v1385 = vpack.c.b16 %v1351, %v1349
    %v1386 = vpack.c.b16 %v1354, %v1352
    %v1387 = vpack.c.b16 %v1355, %v1353
    %1420 = vmatprep.subr.bf16.mxu0 %v1371
    %1421 = vmatpush1.bf16.msra.mxu0 %v1370
    %1422 = vmatprep.subr.bf16.mxu0 %v1369
    %1423 = vmatpush1.bf16.msra.mxu0 %v1368
    %1424 = vmatprep.subr.bf16.mxu0 %v1367
    %1425 = vmatpush1.bf16.msra.mxu0 %v1366
    %1426 = vmatprep.subr.bf16.mxu0 %v1365
    %1427 = vmatpush1.bf16.msra.mxu0 %v1364
    %1428 = vmatprep.subr.bf16.mxu0 %v1363
    %1429 = vmatpush1.bf16.msra.mxu0 %v1362
    %1430 = vmatprep.subr.bf16.mxu0 %v1361
    %1431 = vmatpush1.bf16.msra.mxu0 %v1360
    %1432 = vmatprep.subr.bf16.mxu0 %v1359
    %1433 = vmatpush1.bf16.msra.mxu0 %v1358
    %1434 = vmatprep.subr.bf16.mxu0 %v1357
    %1435 = vmatpush1.bf16.msra.mxu0 %v1356
    %1436 = vmatprep.subr.bf16.mxu0 %v1387
    %1437 = vmatpush2.bf16.msra.mxu0 %v1386
    %1438 = vmatprep.subr.bf16.mxu0 %v1385
    %1439 = vmatpush2.bf16.msra.mxu0 %v1384
    %1440 = vmatprep.subr.bf16.mxu0 %v1383
    %1441 = vmatpush2.bf16.msra.mxu0 %v1382
    %1442 = vmatprep.subr.bf16.mxu0 %v1381
    %1443 = vmatpush2.bf16.msra.mxu0 %v1380
    %1444 = vmatprep.subr.bf16.mxu0 %v1379
    %1445 = vmatpush2.bf16.msra.mxu0 %v1378
    %1446 = vmatprep.subr.bf16.mxu0 %v1377
    %1447 = vmatpush2.bf16.msra.mxu0 %v1376
    %1448 = vmatprep.subr.bf16.mxu0 %v1375
    %1449 = vmatpush2.bf16.msra.mxu0 %v1374
    %1450 = vmatprep.subr.bf16.mxu0 %v1373
    %1451 = vmatpush2.bf16.msra.mxu0 %v1372
    %1452 = vmatprep.mubr.bf16.mxu0 %v1257
    %1453 = vmatmul.mubr.bf16.gmra.mxu0 %v1256
    %v1454 = vpop.f32.mrf.mxu0
    %v1455 = vadd.f32 0.0, %v1454
    %v1456 = vpop.f32.mrf.mxu0
    %v1457 = vadd.f32 0.0, %v1456
    %v1458 = vpop.f32.mrf.mxu0
    %v1459 = vpop.f32.mrf.mxu0
    %1460 = vdwg.mxu0
    %1461 = vst [vmem:[#allocation8] sm:$0xff] %v1455
    %1462 = vst [vmem:[#allocation8 + $0x8] sm:$0xff] %v1457
    // Predicated region
    $region22: #{tpu_custom_call.1} parent=1 // pred_check
      _
    $region23: #{tpu_custom_call.1} parent=1 // pred_check_branch
      %1464 = sbr.rel (0) target = $region25
    $region24: #{tpu_custom_call.1} parent=1 // pred_region
      %s1466 = ssub.s32 256, 256
      %1467 = vsyncadd [#allocation5], %s1466
      %s1469 = sshll.u32 [#allocation8], 4
      %s1470 = int_to_ptr.vmem [resolvable:$true] %s1469
      %1472 = dma.vmem_to_hbm [thread:$0]  %s1470, 256, %s2, [#allocation5]
    $region25: #{tpu_custom_call.1} parent=1 // pred_fallthru
      _
    // Predicated region
    $region26: #{tpu_custom_call.1} parent=1 // pred_check
      _
    $region27: #{tpu_custom_call.1} parent=1 // pred_check_branch
      %1474 = sbr.rel (0) target = $region29
    $region28: #{tpu_custom_call.1} parent=1 // pred_region
      %1475 = dma.done [#allocation5], 256
    $region29: #{tpu_custom_call.1} parent=1 // pred_fallthru
      _
    %1476 = vsyncpa [#allocation4], 1
    %1477 = vsyncpa [#allocation5], 1
    %1478 = vsyncpa [#allocation6], 1

</llo_original>
